<compile_context>
chip_gen: v7x
topology: tpu7x:2x2x1
jax: 0.10.0
libtpu: 0.0.40
codegen_flags: <defaults>
</compile_context>

<pallas_src>
import functools

import jax
import jax.numpy as jnp
from jax.experimental import pallas as pl
from jax.experimental.pallas import tpu as pltpu


LAYER_DIMS = [(5, 16), (16, 32), (32, 64), (64, 32), (32, 16), (16, 8), (8, 2)]


# -----------------------------------------------------------------------------
# Kernel: the entire MLP for one [F, tile_n] column tile.
# -----------------------------------------------------------------------------
def _mlp_kernel(x_ref,
                w1_ref, b1_ref, w2_ref, b2_ref, w3_ref, b3_ref,
                w4_ref, b4_ref, w5_ref, b5_ref, w6_ref, b6_ref,
                w7_ref, b7_ref,
                o_ref, *, compute_dtype):
    h = x_ref[...]  # [5, tile_n], already in compute_dtype

    def layer(h, w_ref, b_ref, activate):
        # W [out, in] @ h [in, tile_n] -> [out, tile_n]; batch on the lane axis.
        y = jnp.dot(w_ref[...], h, preferred_element_type=jnp.float32)
        y = y + b_ref[...]  # bias [out, 1] broadcasts over lanes (f32 add)
        if activate:
            # tanh at compute_dtype: bf16 doubles per-vreg elements on v6e/v7x.
            return jnp.tanh(y.astype(compute_dtype))
        return y

    # fc1..fc6 with tanh; Dropout(p=0.1) is identity at inference.
    # TODO(synk): add pltpu.prng_random_bits-based masking if training-mode
    # dropout is ever needed.
    h = layer(h, w1_ref, b1_ref, True)
    h = layer(h, w2_ref, b2_ref, True)
    h = layer(h, w3_ref, b3_ref, True)
    h = layer(h, w4_ref, b4_ref, True)
    h = layer(h, w5_ref, b5_ref, True)
    h = layer(h, w6_ref, b6_ref, True)
    # fc7: no activation.
    o_ref[...] = layer(h, w7_ref, b7_ref, False).astype(o_ref.dtype)


# -----------------------------------------------------------------------------
# Parameters: nn.Linear-style init.  W stored PyTorch-native [out, in]; bias
# stored as [out, 1] so it broadcasts over the lane (batch) axis in-kernel.
# -----------------------------------------------------------------------------
def init_params(key):
    params = []
    for fan_in, fan_out in LAYER_DIMS:
        key, kw, kb = jax.random.split(key, 3)
        bound = 1.0 / (fan_in ** 0.5)
        w = jax.random.uniform(kw, (fan_out, fan_in), jnp.float32, -bound, bound)
        b = jax.random.uniform(kb, (fan_out, 1), jnp.float32, -bound, bound)
        params.append((w, b))
    return params


# -----------------------------------------------------------------------------
# Wrapper: feature-major transpose, adaptive padding, BlockSpecs, pallas_call.
# -----------------------------------------------------------------------------
def rgb2normnet_forward(x, params, *, tile_n=2048, compute_dtype=jnp.float32):
    """Forward pass.  x: [N, 5] float.  Returns [N, 2] float32."""
    N, F = x.shape
    assert F == 5, "RGB2NormNetR1 expects 5 input features"
    assert tile_n % 128 == 0, "tile_n must be a multiple of the 128-lane width"

    # Adaptive tile: never pad a small batch up to a huge tile, but keep the
    # lane axis a multiple of 128 so stores stay unmasked.
    n_round = pl.cdiv(N, 128) * 128
    tile = min(tile_n, n_round)
    n_pad = pl.cdiv(N, tile) * tile

    # Feature-major: batch rides the lane axis; padding sliced off afterwards.
    xt = x.astype(compute_dtype).T                        # [5, N]
    if n_pad != N:
        xt = jnp.pad(xt, ((0, 0), (0, n_pad - N)))

    grid = (n_pad // tile,)

    in_specs = [pl.BlockSpec((F, tile), lambda i: (0, i))]
    flat_params = []
    for w, b in params:
        # Constant index_maps: each parameter block is DMA'd once, reused
        # across all grid steps.
        in_specs.append(pl.BlockSpec(w.shape, lambda i: (0, 0)))
        in_specs.append(pl.BlockSpec(b.shape, lambda i: (0, 0)))
        flat_params.append(w.astype(compute_dtype))       # matmul operand
        flat_params.append(b.astype(jnp.float32))         # added to f32 acc
    out_spec = pl.BlockSpec((2, tile), lambda i: (0, i))

    # Advisory cost estimate for XLA's scheduler.
    flops_per_row = 2 * sum(fi * fo for fi, fo in LAYER_DIMS)    # 10688
    trans_per_row = sum(fo for _, fo in LAYER_DIMS[:-1])         # 168
    param_bytes = sum(int(p.size) * p.dtype.itemsize for p in flat_params)
    io_bytes = n_pad * (F * xt.dtype.itemsize + 2 * 4)
    cost = pl.CostEstimate(flops=flops_per_row * n_pad,
                           transcendentals=trans_per_row * n_pad,
                           bytes_accessed=io_bytes + param_bytes)

    kernel = functools.partial(_mlp_kernel, compute_dtype=compute_dtype)

    out_t = pl.pallas_call(
        kernel,
        out_shape=jax.ShapeDtypeStruct((2, n_pad), jnp.float32),
        grid_spec=pltpu.PrefetchScalarGridSpec(
            num_scalar_prefetch=0,
            grid=grid,
            in_specs=in_specs,
            out_specs=out_spec,
        ),
        compiler_params=pltpu.CompilerParams(
            dimension_semantics=("parallel",),
        ),
        cost_estimate=cost,
    )(xt, *flat_params)

    return out_t[:, :N].T                                 # back to [N, 2]


def reference_forward(x, params):
    h = x
    for i, (w, b) in enumerate(params):
        h = h @ w.T + b[:, 0]
        if i < len(params) - 1:
            h = jnp.tanh(h)
    return h


if __name__ == "__main__":
    key = jax.random.PRNGKey(0)
    key, kx = jax.random.split(key)

    # Small demo: 600 pixels' (R, G, B, x, y) rows — deliberately NOT a
    # multiple of 128 to exercise the padding path.  Production use:
    # tile_n=2048..4096 over 1e4..1e5 rows per frame.
    N = 600
    x = jax.random.normal(kx, (N, 5), jnp.float32)
    params = init_params(key)

    ref = reference_forward(x, params)

    # Default config: adaptive tile (N=600 -> one 640-wide tile), f32 compute.
    out = jax.block_until_ready(rgb2normnet_forward(x, params))
    assert out.shape == (N, 2)
    assert jnp.allclose(out, ref, atol=1e-5, rtol=1e-5), "f32 mismatch vs reference"

    # Multi-tile grid path (tile_n=256 -> 3 grid steps).
    out_tiled = jax.block_until_ready(rgb2normnet_forward(x, params, tile_n=256))
    assert jnp.allclose(out_tiled, ref, atol=1e-5, rtol=1e-5), "tiled mismatch vs reference"

    # bf16 compute path (the v6e/v7x perf configuration) — looser tolerance
    # for bf16 rounding through six tanh layers.
    out_bf16 = jax.block_until_ready(
        rgb2normnet_forward(x, params, tile_n=256, compute_dtype=jnp.bfloat16))
    assert jnp.allclose(out_bf16, ref, atol=5e-2, rtol=5e-2), "bf16 mismatch vs reference"

    print("KERNEL_OK")
</pallas_src>

<mosaic_0001>
module attributes {stable_mosaic.version = 11 : i64} {
  func.func @_mlp_kernel(%arg0: i32, %arg1: memref<5x640xf32, #tpu.memory_space<vmem>>, %arg2: memref<16x5xf32, #tpu.memory_space<vmem>>, %arg3: memref<16x1xf32, #tpu.memory_space<vmem>>, %arg4: memref<32x16xf32, #tpu.memory_space<vmem>>, %arg5: memref<32x1xf32, #tpu.memory_space<vmem>>, %arg6: memref<64x32xf32, #tpu.memory_space<vmem>>, %arg7: memref<64x1xf32, #tpu.memory_space<vmem>>, %arg8: memref<32x64xf32, #tpu.memory_space<vmem>>, %arg9: memref<32x1xf32, #tpu.memory_space<vmem>>, %arg10: memref<16x32xf32, #tpu.memory_space<vmem>>, %arg11: memref<16x1xf32, #tpu.memory_space<vmem>>, %arg12: memref<8x16xf32, #tpu.memory_space<vmem>>, %arg13: memref<8x1xf32, #tpu.memory_space<vmem>>, %arg14: memref<2x8xf32, #tpu.memory_space<vmem>>, %arg15: memref<2x1xf32, #tpu.memory_space<vmem>>, %arg16: memref<2x640xf32, #tpu.memory_space<vmem>>) attributes {dimension_semantics = [#tpu.dimension_semantics<parallel>], iteration_bounds = array<i64: 1>, scalar_prefetch = 0 : i64, scratch_operands = 0 : i64, tpu.core_type = #tpu.core_type<tc>, window_params = [{transform_indices = @transform_0, window_bounds = array<i64: 5, 640>}, {pipeline_mode = #tpu.pipeline_mode<synchronous>, transform_indices = @transform_1, window_bounds = array<i64: 16, 5>}, {pipeline_mode = #tpu.pipeline_mode<synchronous>, transform_indices = @transform_2, window_bounds = array<i64: 16, 1>}, {pipeline_mode = #tpu.pipeline_mode<synchronous>, transform_indices = @transform_3, window_bounds = array<i64: 32, 16>}, {pipeline_mode = #tpu.pipeline_mode<synchronous>, transform_indices = @transform_4, window_bounds = array<i64: 32, 1>}, {pipeline_mode = #tpu.pipeline_mode<synchronous>, transform_indices = @transform_5, window_bounds = array<i64: 64, 32>}, {pipeline_mode = #tpu.pipeline_mode<synchronous>, transform_indices = @transform_6, window_bounds = array<i64: 64, 1>}, {pipeline_mode = #tpu.pipeline_mode<synchronous>, transform_indices = @transform_7, window_bounds = array<i64: 32, 64>}, {pipeline_mode = #tpu.pipeline_mode<synchronous>, transform_indices = @transform_8, window_bounds = array<i64: 32, 1>}, {pipeline_mode = #tpu.pipeline_mode<synchronous>, transform_indices = @transform_9, window_bounds = array<i64: 16, 32>}, {pipeline_mode = #tpu.pipeline_mode<synchronous>, transform_indices = @transform_10, window_bounds = array<i64: 16, 1>}, {pipeline_mode = #tpu.pipeline_mode<synchronous>, transform_indices = @transform_11, window_bounds = array<i64: 8, 16>}, {pipeline_mode = #tpu.pipeline_mode<synchronous>, transform_indices = @transform_12, window_bounds = array<i64: 8, 1>}, {pipeline_mode = #tpu.pipeline_mode<synchronous>, transform_indices = @transform_13, window_bounds = array<i64: 2, 8>}, {pipeline_mode = #tpu.pipeline_mode<synchronous>, transform_indices = @transform_14, window_bounds = array<i64: 2, 1>}, {transform_indices = @transform_15, window_bounds = array<i64: 2, 640>}]} {
    %c0 = arith.constant 0 : index
    %c0_0 = arith.constant 0 : index
    %0 = vector.load %arg1[%c0, %c0_0] : memref<5x640xf32, #tpu.memory_space<vmem>>, vector<5x640xf32>
    %c0_1 = arith.constant 0 : index
    %c0_2 = arith.constant 0 : index
    %1 = vector.load %arg2[%c0_1, %c0_2] : memref<16x5xf32, #tpu.memory_space<vmem>>, vector<16x5xf32>
    %cst = arith.constant dense<0.000000e+00> : vector<16x640xf32>
    %2 = tpu.matmul %1, %0, %cst {dimension_numbers = #tpu.dot_dimension_numbers<[1], [0], [0], [1], [0, 0, 1, 1], [], []>} : vector<16x5xf32>, vector<5x640xf32>, vector<16x640xf32> -> vector<16x640xf32>
    %c0_3 = arith.constant 0 : index
    %c0_4 = arith.constant 0 : index
    %3 = vector.load %arg3[%c0_3, %c0_4] : memref<16x1xf32, #tpu.memory_space<vmem>>, vector<16x1xf32>
    %4 = vector.broadcast %3 : vector<16x1xf32> to vector<16x640xf32>
    %5 = arith.addf %2, %4 : vector<16x640xf32>
    %6 = math.tanh %5 : vector<16x640xf32>
    %c0_5 = arith.constant 0 : index
    %c0_6 = arith.constant 0 : index
    %7 = vector.load %arg4[%c0_5, %c0_6] : memref<32x16xf32, #tpu.memory_space<vmem>>, vector<32x16xf32>
    %cst_7 = arith.constant dense<0.000000e+00> : vector<32x640xf32>
    %8 = tpu.matmul %7, %6, %cst_7 {dimension_numbers = #tpu.dot_dimension_numbers<[1], [0], [0], [1], [0, 0, 1, 1], [], []>} : vector<32x16xf32>, vector<16x640xf32>, vector<32x640xf32> -> vector<32x640xf32>
    %c0_8 = arith.constant 0 : index
    %c0_9 = arith.constant 0 : index
    %9 = vector.load %arg5[%c0_8, %c0_9] : memref<32x1xf32, #tpu.memory_space<vmem>>, vector<32x1xf32>
    %10 = vector.broadcast %9 : vector<32x1xf32> to vector<32x640xf32>
    %11 = arith.addf %8, %10 : vector<32x640xf32>
    %12 = math.tanh %11 : vector<32x640xf32>
    %c0_10 = arith.constant 0 : index
    %c0_11 = arith.constant 0 : index
    %13 = vector.load %arg6[%c0_10, %c0_11] : memref<64x32xf32, #tpu.memory_space<vmem>>, vector<64x32xf32>
    %cst_12 = arith.constant dense<0.000000e+00> : vector<64x640xf32>
    %14 = tpu.matmul %13, %12, %cst_12 {dimension_numbers = #tpu.dot_dimension_numbers<[1], [0], [0], [1], [0, 0, 1, 1], [], []>} : vector<64x32xf32>, vector<32x640xf32>, vector<64x640xf32> -> vector<64x640xf32>
    %c0_13 = arith.constant 0 : index
    %c0_14 = arith.constant 0 : index
    %15 = vector.load %arg7[%c0_13, %c0_14] : memref<64x1xf32, #tpu.memory_space<vmem>>, vector<64x1xf32>
    %16 = vector.broadcast %15 : vector<64x1xf32> to vector<64x640xf32>
    %17 = arith.addf %14, %16 : vector<64x640xf32>
    %18 = math.tanh %17 : vector<64x640xf32>
    %c0_15 = arith.constant 0 : index
    %c0_16 = arith.constant 0 : index
    %19 = vector.load %arg8[%c0_15, %c0_16] : memref<32x64xf32, #tpu.memory_space<vmem>>, vector<32x64xf32>
    %cst_17 = arith.constant dense<0.000000e+00> : vector<32x640xf32>
    %20 = tpu.matmul %19, %18, %cst_17 {dimension_numbers = #tpu.dot_dimension_numbers<[1], [0], [0], [1], [0, 0, 1, 1], [], []>} : vector<32x64xf32>, vector<64x640xf32>, vector<32x640xf32> -> vector<32x640xf32>
    %c0_18 = arith.constant 0 : index
    %c0_19 = arith.constant 0 : index
    %21 = vector.load %arg9[%c0_18, %c0_19] : memref<32x1xf32, #tpu.memory_space<vmem>>, vector<32x1xf32>
    %22 = vector.broadcast %21 : vector<32x1xf32> to vector<32x640xf32>
    %23 = arith.addf %20, %22 : vector<32x640xf32>
    %24 = math.tanh %23 : vector<32x640xf32>
    %c0_20 = arith.constant 0 : index
    %c0_21 = arith.constant 0 : index
    %25 = vector.load %arg10[%c0_20, %c0_21] : memref<16x32xf32, #tpu.memory_space<vmem>>, vector<16x32xf32>
    %cst_22 = arith.constant dense<0.000000e+00> : vector<16x640xf32>
    %26 = tpu.matmul %25, %24, %cst_22 {dimension_numbers = #tpu.dot_dimension_numbers<[1], [0], [0], [1], [0, 0, 1, 1], [], []>} : vector<16x32xf32>, vector<32x640xf32>, vector<16x640xf32> -> vector<16x640xf32>
    %c0_23 = arith.constant 0 : index
    %c0_24 = arith.constant 0 : index
    %27 = vector.load %arg11[%c0_23, %c0_24] : memref<16x1xf32, #tpu.memory_space<vmem>>, vector<16x1xf32>
    %28 = vector.broadcast %27 : vector<16x1xf32> to vector<16x640xf32>
    %29 = arith.addf %26, %28 : vector<16x640xf32>
    %30 = math.tanh %29 : vector<16x640xf32>
    %c0_25 = arith.constant 0 : index
    %c0_26 = arith.constant 0 : index
    %31 = vector.load %arg12[%c0_25, %c0_26] : memref<8x16xf32, #tpu.memory_space<vmem>>, vector<8x16xf32>
    %cst_27 = arith.constant dense<0.000000e+00> : vector<8x640xf32>
    %32 = tpu.matmul %31, %30, %cst_27 {dimension_numbers = #tpu.dot_dimension_numbers<[1], [0], [0], [1], [0, 0, 1, 1], [], []>} : vector<8x16xf32>, vector<16x640xf32>, vector<8x640xf32> -> vector<8x640xf32>
    %c0_28 = arith.constant 0 : index
    %c0_29 = arith.constant 0 : index
    %33 = vector.load %arg13[%c0_28, %c0_29] : memref<8x1xf32, #tpu.memory_space<vmem>>, vector<8x1xf32>
    %34 = vector.broadcast %33 : vector<8x1xf32> to vector<8x640xf32>
    %35 = arith.addf %32, %34 : vector<8x640xf32>
    %36 = math.tanh %35 : vector<8x640xf32>
    %c0_30 = arith.constant 0 : index
    %c0_31 = arith.constant 0 : index
    %37 = vector.load %arg14[%c0_30, %c0_31] : memref<2x8xf32, #tpu.memory_space<vmem>>, vector<2x8xf32>
    %cst_32 = arith.constant dense<0.000000e+00> : vector<2x640xf32>
    %38 = tpu.matmul %37, %36, %cst_32 {dimension_numbers = #tpu.dot_dimension_numbers<[1], [0], [0], [1], [0, 0, 1, 1], [], []>} : vector<2x8xf32>, vector<8x640xf32>, vector<2x640xf32> -> vector<2x640xf32>
    %c0_33 = arith.constant 0 : index
    %c0_34 = arith.constant 0 : index
    %39 = vector.load %arg15[%c0_33, %c0_34] : memref<2x1xf32, #tpu.memory_space<vmem>>, vector<2x1xf32>
    %40 = vector.broadcast %39 : vector<2x1xf32> to vector<2x640xf32>
    %41 = arith.addf %38, %40 : vector<2x640xf32>
    %c0_35 = arith.constant 0 : index
    %c0_36 = arith.constant 0 : index
    %42 = vector.load %arg16[%c0_35, %c0_36] : memref<2x640xf32, #tpu.memory_space<vmem>>, vector<2x640xf32>
    tpu.vector_store %arg16[%c0_35, %c0_36], %41 {strides = array<i32>} : memref<2x640xf32, #tpu.memory_space<vmem>>, vector<2x640xf32>,
    return
  }
  func.func @transform_0(%arg0: i32) -> (i32, i32) {
    %c0_i32 = arith.constant 0 : i32
    %c0_i32_0 = arith.constant 0 : i32
    return %c0_i32, %arg0 : i32, i32
  }
  func.func @transform_1(%arg0: i32) -> (i32, i32) {
    %c0_i32 = arith.constant 0 : i32
    %c0_i32_0 = arith.constant 0 : i32
    %c0_i32_1 = arith.constant 0 : i32
    return %c0_i32, %c0_i32_0 : i32, i32
  }
  func.func @transform_2(%arg0: i32) -> (i32, i32) {
    %c0_i32 = arith.constant 0 : i32
    %c0_i32_0 = arith.constant 0 : i32
    %c0_i32_1 = arith.constant 0 : i32
    return %c0_i32, %c0_i32_0 : i32, i32
  }
  func.func @transform_3(%arg0: i32) -> (i32, i32) {
    %c0_i32 = arith.constant 0 : i32
    %c0_i32_0 = arith.constant 0 : i32
    %c0_i32_1 = arith.constant 0 : i32
    return %c0_i32, %c0_i32_0 : i32, i32
  }
  func.func @transform_4(%arg0: i32) -> (i32, i32) {
    %c0_i32 = arith.constant 0 : i32
    %c0_i32_0 = arith.constant 0 : i32
    %c0_i32_1 = arith.constant 0 : i32
    return %c0_i32, %c0_i32_0 : i32, i32
  }
  func.func @transform_5(%arg0: i32) -> (i32, i32) {
    %c0_i32 = arith.constant 0 : i32
    %c0_i32_0 = arith.constant 0 : i32
    %c0_i32_1 = arith.constant 0 : i32
    return %c0_i32, %c0_i32_0 : i32, i32
  }
  func.func @transform_6(%arg0: i32) -> (i32, i32) {
    %c0_i32 = arith.constant 0 : i32
    %c0_i32_0 = arith.constant 0 : i32
    %c0_i32_1 = arith.constant 0 : i32
    return %c0_i32, %c0_i32_0 : i32, i32
  }
  func.func @transform_7(%arg0: i32) -> (i32, i32) {
    %c0_i32 = arith.constant 0 : i32
    %c0_i32_0 = arith.constant 0 : i32
    %c0_i32_1 = arith.constant 0 : i32
    return %c0_i32, %c0_i32_0 : i32, i32
  }
  func.func @transform_8(%arg0: i32) -> (i32, i32) {
    %c0_i32 = arith.constant 0 : i32
    %c0_i32_0 = arith.constant 0 : i32
    %c0_i32_1 = arith.constant 0 : i32
    return %c0_i32, %c0_i32_0 : i32, i32
  }
  func.func @transform_9(%arg0: i32) -> (i32, i32) {
    %c0_i32 = arith.constant 0 : i32
    %c0_i32_0 = arith.constant 0 : i32
    %c0_i32_1 = arith.constant 0 : i32
    return %c0_i32, %c0_i32_0 : i32, i32
  }
  func.func @transform_10(%arg0: i32) -> (i32, i32) {
    %c0_i32 = arith.constant 0 : i32
    %c0_i32_0 = arith.constant 0 : i32
    %c0_i32_1 = arith.constant 0 : i32
    return %c0_i32, %c0_i32_0 : i32, i32
  }
  func.func @transform_11(%arg0: i32) -> (i32, i32) {
    %c0_i32 = arith.constant 0 : i32
    %c0_i32_0 = arith.constant 0 : i32
    %c0_i32_1 = arith.constant 0 : i32
    return %c0_i32, %c0_i32_0 : i32, i32
  }
  func.func @transform_12(%arg0: i32) -> (i32, i32) {
    %c0_i32 = arith.constant 0 : i32
    %c0_i32_0 = arith.constant 0 : i32
    %c0_i32_1 = arith.constant 0 : i32
    return %c0_i32, %c0_i32_0 : i32, i32
  }
  func.func @transform_13(%arg0: i32) -> (i32, i32) {
    %c0_i32 = arith.constant 0 : i32
    %c0_i32_0 = arith.constant 0 : i32
    %c0_i32_1 = arith.constant 0 : i32
    return %c0_i32, %c0_i32_0 : i32, i32
  }
  func.func @transform_14(%arg0: i32) -> (i32, i32) {
    %c0_i32 = arith.constant 0 : i32
    %c0_i32_0 = arith.constant 0 : i32
    %c0_i32_1 = arith.constant 0 : i32
    return %c0_i32, %c0_i32_0 : i32, i32
  }
  func.func @transform_15(%arg0: i32) -> (i32, i32) {
    %c0_i32 = arith.constant 0 : i32
    %c0_i32_0 = arith.constant 0 : i32
    return %c0_i32, %arg0 : i32, i32
  }
}

</mosaic_0001>

<llo_original>
// kernel: tpu_custom_call.1
$region0: #{tpu_custom_call.1}
  #allocation0 [shape = 'u32[]', space=smem, size = 0x4, offset = 0x4, fixed_abs, tag = 'smem constant byte address 0x4 - core index']
  #allocation1 [shape = 'u32[144,128]{1,0:T(1,128)}', space=vmem, size = 0x12000, scoped, tag = 'internal scratch']
  %s0 = inlined_call_operand.vmem [shape: f32[5,640], index: 0, kind: input, shape index: {}]
  %s1 = inlined_call_operand.vmem [shape: f32[16,5], index: 1, kind: input, shape index: {}]
  %s2 = inlined_call_operand.vmem [shape: f32[16,1], index: 2, kind: input, shape index: {}]
  %s3 = inlined_call_operand.vmem [shape: f32[32,16], index: 3, kind: input, shape index: {}]
  %s4 = inlined_call_operand.vmem [shape: f32[32,1], index: 4, kind: input, shape index: {}]
  %s5 = inlined_call_operand.vmem [shape: f32[64,32], index: 5, kind: input, shape index: {}]
  %s6 = inlined_call_operand.vmem [shape: f32[64,1], index: 6, kind: input, shape index: {}]
  %s7 = inlined_call_operand.vmem [shape: f32[32,64], index: 7, kind: input, shape index: {}]
  %s8 = inlined_call_operand.vmem [shape: f32[32,1], index: 8, kind: input, shape index: {}]
  %s9 = inlined_call_operand.vmem [shape: f32[16,32], index: 9, kind: input, shape index: {}]
  %s10 = inlined_call_operand.vmem [shape: f32[16,1], index: 10, kind: input, shape index: {}]
  %s11 = inlined_call_operand.vmem [shape: f32[8,16], index: 11, kind: input, shape index: {}]
  %s12 = inlined_call_operand.vmem [shape: f32[8,1], index: 12, kind: input, shape index: {}]
  %s13 = inlined_call_operand.vmem [shape: f32[2,8], index: 13, kind: input, shape index: {}]
  %s14 = inlined_call_operand.vmem [shape: f32[2,1], index: 14, kind: input, shape index: {}]
  %s15 = inlined_call_operand.hbm [shape: f32[2,640], index: 15, kind: output, shape index: {}]
  %s16 = sld [smem:[#allocation0]]
  $region70: #{tpu_custom_call.1} parent=0
    _
  %s18 = ssub.s32 1, %s16
  %s19 = scalar_select 0, %s18, %s16
  $region1: #{tpu_custom_call.1} parent=0
    #allocation2 [shape = 'u8[5120]{0}', space=vmem, size = 0x1400, scoped, tag = 'output window, operand 0, single buffered']
    #allocation3 [shape = 's32[1]{0}', space=sflag, size = 0x4, scoped, tag = 'scoped memory for tpu_custom_call.1']
    %20 = vsyncpa [#allocation3], 0
    // Predicated region
    $region2: #{tpu_custom_call.1} parent=1 // pred_check
      _
    $region3: #{tpu_custom_call.1} parent=1 // pred_check_branch
      %22 = sbr.rel (0) target = $region5
    $region4: #{tpu_custom_call.1} parent=1 // pred_region
      _
    $region5: #{tpu_custom_call.1} parent=1 // pred_fallthru
      _
    // Predicated region
    $region6: #{tpu_custom_call.1} parent=1 // pred_check
      _
    $region7: #{tpu_custom_call.1} parent=1 // pred_check_branch
      %24 = sbr.rel (0) target = $region9
    $region8: #{tpu_custom_call.1} parent=1 // pred_region
      _
    $region9: #{tpu_custom_call.1} parent=1 // pred_fallthru
      _
    // Predicated region
    $region10: #{tpu_custom_call.1} parent=1 // pred_check
      _
    $region11: #{tpu_custom_call.1} parent=1 // pred_check_branch
      %26 = sbr.rel (0) target = $region13
    $region12: #{tpu_custom_call.1} parent=1 // pred_region
      _
    $region13: #{tpu_custom_call.1} parent=1 // pred_fallthru
      _
    // Predicated region
    $region14: #{tpu_custom_call.1} parent=1 // pred_check
      _
    $region15: #{tpu_custom_call.1} parent=1 // pred_check_branch
      %28 = sbr.rel (0) target = $region17
    $region16: #{tpu_custom_call.1} parent=1 // pred_region
      _
    $region17: #{tpu_custom_call.1} parent=1 // pred_fallthru
      _
    // Predicated region
    $region18: #{tpu_custom_call.1} parent=1 // pred_check
      _
    $region19: #{tpu_custom_call.1} parent=1 // pred_check_branch
      %30 = sbr.rel (0) target = $region21
    $region20: #{tpu_custom_call.1} parent=1 // pred_region
      _
    $region21: #{tpu_custom_call.1} parent=1 // pred_fallthru
      _
    // Predicated region
    $region22: #{tpu_custom_call.1} parent=1 // pred_check
      _
    $region23: #{tpu_custom_call.1} parent=1 // pred_check_branch
      %32 = sbr.rel (0) target = $region25
    $region24: #{tpu_custom_call.1} parent=1 // pred_region
      _
    $region25: #{tpu_custom_call.1} parent=1 // pred_fallthru
      _
    // Predicated region
    $region26: #{tpu_custom_call.1} parent=1 // pred_check
      _
    $region27: #{tpu_custom_call.1} parent=1 // pred_check_branch
      %34 = sbr.rel (0) target = $region29
    $region28: #{tpu_custom_call.1} parent=1 // pred_region
      _
    $region29: #{tpu_custom_call.1} parent=1 // pred_fallthru
      _
    // Predicated region
    $region30: #{tpu_custom_call.1} parent=1 // pred_check
      _
    $region31: #{tpu_custom_call.1} parent=1 // pred_check_branch
      %36 = sbr.rel (0) target = $region33
    $region32: #{tpu_custom_call.1} parent=1 // pred_region
      _
    $region33: #{tpu_custom_call.1} parent=1 // pred_fallthru
      _
    // Predicated region
    $region34: #{tpu_custom_call.1} parent=1 // pred_check
      _
    $region35: #{tpu_custom_call.1} parent=1 // pred_check_branch
      %38 = sbr.rel (0) target = $region37
    $region36: #{tpu_custom_call.1} parent=1 // pred_region
      _
    $region37: #{tpu_custom_call.1} parent=1 // pred_fallthru
      _
    // Predicated region
    $region38: #{tpu_custom_call.1} parent=1 // pred_check
      _
    $region39: #{tpu_custom_call.1} parent=1 // pred_check_branch
      %40 = sbr.rel (0) target = $region41
    $region40: #{tpu_custom_call.1} parent=1 // pred_region
      _
    $region41: #{tpu_custom_call.1} parent=1 // pred_fallthru
      _
    // Predicated region
    $region42: #{tpu_custom_call.1} parent=1 // pred_check
      _
    $region43: #{tpu_custom_call.1} parent=1 // pred_check_branch
      %42 = sbr.rel (0) target = $region45
    $region44: #{tpu_custom_call.1} parent=1 // pred_region
      _
    $region45: #{tpu_custom_call.1} parent=1 // pred_fallthru
      _
    // Predicated region
    $region46: #{tpu_custom_call.1} parent=1 // pred_check
      _
    $region47: #{tpu_custom_call.1} parent=1 // pred_check_branch
      %44 = sbr.rel (0) target = $region49
    $region48: #{tpu_custom_call.1} parent=1 // pred_region
      _
    $region49: #{tpu_custom_call.1} parent=1 // pred_fallthru
      _
    // Predicated region
    $region50: #{tpu_custom_call.1} parent=1 // pred_check
      _
    $region51: #{tpu_custom_call.1} parent=1 // pred_check_branch
      %46 = sbr.rel (0) target = $region53
    $region52: #{tpu_custom_call.1} parent=1 // pred_region
      _
    $region53: #{tpu_custom_call.1} parent=1 // pred_fallthru
      _
    // Predicated region
    $region54: #{tpu_custom_call.1} parent=1 // pred_check
      _
    $region55: #{tpu_custom_call.1} parent=1 // pred_check_branch
      %48 = sbr.rel (0) target = $region57
    $region56: #{tpu_custom_call.1} parent=1 // pred_region
      _
    $region57: #{tpu_custom_call.1} parent=1 // pred_fallthru
      _
    // Predicated region
    $region58: #{tpu_custom_call.1} parent=1 // pred_check
      _
    $region59: #{tpu_custom_call.1} parent=1 // pred_check_branch
      %50 = sbr.rel (0) target = $region61
    $region60: #{tpu_custom_call.1} parent=1 // pred_region
      _
    $region61: #{tpu_custom_call.1} parent=1 // pred_fallthru
      _
    %v51 = vld [vmem:[%s0] sm:$0x1f]
    %v52 = vld [vmem:[%s0 + $0x8] sm:$0x1f]
    %v53 = vld [vmem:[%s0 + $0x10] sm:$0x1f]
    %v54 = vld [vmem:[%s0 + $0x18] sm:$0x1f]
    %v55 = vld [vmem:[%s0 + $0x20] sm:$0x1f]
    %v56 = vld [vmem:[%s1] sm:$0xff]
    %v57 = vld [vmem:[%s1 + $0x8] sm:$0xff]
    %v58 = vld [vmem:[%s2] sm:$0xff]
    %v59 = vld [vmem:[%s2 + $0x8] sm:$0xff]
    %61 = vset.pattern.permute.xlu0 0
    %62 = vperm.xlu0 %61, %v58
    %v63 = vpop.permute.xlu0 %62
    %66 = vset.pattern.permute.xlu0 0
    %67 = vperm.xlu0 %66, %v59
    %v68 = vpop.permute.xlu0 %67
    %vm70 = vcmask 39936
    %v72 = vsel %vm70, %v56, 0
    %v75 = vsel %vm70, %v57, 0
    %vm77 = vcmask 1044480
    %v79 = vsel %vm77, %v51, 0
    %v82 = vsel %vm77, %v52, 0
    %v85 = vsel %vm77, %v53, 0
    %v88 = vsel %vm77, %v54, 0
    %v91 = vsel %vm77, %v55, 0
    %93 = vmatprep.subr.mxu0 %v82
    %94 = vmatpush1.msra.mxu0 %v79
    %95 = vmatprep.subr.mxu0 0.0
    %96 = vmatpush1.msra.mxu0 0.0
    %97 = vmatprep.subr.mxu0 0.0
    %98 = vmatpush1.msra.mxu0 0.0
    %99 = vmatprep.subr.mxu0 0.0
    %100 = vmatpush1.msra.mxu0 0.0
    %101 = vmatprep.subr.mxu0 0.0
    %102 = vmatpush1.msra.mxu0 0.0
    %103 = vmatprep.subr.mxu0 0.0
    %104 = vmatpush1.msra.mxu0 0.0
    %105 = vmatprep.subr.mxu0 0.0
    %106 = vmatpush1.msra.mxu0 0.0
    %107 = vmatprep.subr.mxu0 0.0
    %108 = vmatpush1.msra.mxu0 0.0
    %109 = vmatprep.subr.mxu0 0.0
    %110 = vmatpush1.msra.mxu0 0.0
    %111 = vmatprep.subr.mxu0 0.0
    %112 = vmatpush1.msra.mxu0 0.0
    %113 = vmatprep.subr.mxu0 0.0
    %114 = vmatpush1.msra.mxu0 0.0
    %115 = vmatprep.subr.mxu0 0.0
    %116 = vmatpush1.msra.mxu0 0.0
    %117 = vmatprep.subr.mxu0 0.0
    %118 = vmatpush1.msra.mxu0 0.0
    %119 = vmatprep.subr.mxu0 0.0
    %120 = vmatpush1.msra.mxu0 0.0
    %121 = vmatprep.subr.mxu0 0.0
    %122 = vmatpush1.msra.mxu0 0.0
    %123 = vmatprep.subr.mxu0 0.0
    %124 = vmatpush1.msra.mxu0 0.0
    %125 = vmatprep.subr.mxu0 0.0
    %126 = vmatpush1.msra.mxu0 0.0
    %127 = vmatprep.subr.mxu0 0.0
    %128 = vmatpush1.msra.mxu0 0.0
    %129 = vmatprep.subr.mxu0 0.0
    %130 = vmatpush1.msra.mxu0 0.0
    %131 = vmatprep.subr.mxu0 0.0
    %132 = vmatpush1.msra.mxu0 0.0
    %133 = vmatprep.subr.mxu0 0.0
    %134 = vmatpush1.msra.mxu0 0.0
    %135 = vmatprep.subr.mxu0 0.0
    %136 = vmatpush1.msra.mxu0 0.0
    %137 = vmatprep.subr.mxu0 0.0
    %138 = vmatpush1.msra.mxu0 0.0
    %139 = vmatprep.subr.mxu0 0.0
    %140 = vmatpush1.msra.mxu0 0.0
    %141 = vmatprep.subr.mxu0 0.0
    %142 = vmatpush1.msra.mxu0 0.0
    %143 = vmatprep.subr.mxu0 0.0
    %144 = vmatpush1.msra.mxu0 0.0
    %145 = vmatprep.subr.mxu0 0.0
    %146 = vmatpush1.msra.mxu0 0.0
    %147 = vmatprep.subr.mxu0 0.0
    %148 = vmatpush1.msra.mxu0 0.0
    %149 = vmatprep.subr.mxu0 0.0
    %150 = vmatpush1.msra.mxu0 0.0
    %151 = vmatprep.subr.mxu0 0.0
    %152 = vmatpush1.msra.mxu0 0.0
    %153 = vmatprep.subr.mxu0 0.0
    %154 = vmatpush1.msra.mxu0 0.0
    %155 = vmatprep.subr.mxu0 0.0
    %156 = vmatpush1.msra.mxu0 0.0
    %157 = vmatprep.mubr.f32.mxu0 0.0
    %158 = vmatmul.mubr.f32.gmra.mrb[0].mxu0 %v72
    %v159 = vpop.f32.mrb[0].mxu0
    %v160 = vadd.f32 %v63, %v159
    %v161 = vpop.f32.mrb[0].mxu0
    %v162 = vadd.f32 %v63, %v161
    %163 = vmatprep.mubr.f32.mxu0 0.0
    %164 = vmatmul.mubr.f32.gmra.mrb[0].mxu0 %v75
    %v165 = vpop.f32.mrb[0].mxu0
    %v166 = vadd.f32 %v68, %v165
    %v167 = vpop.f32.mrb[0].mxu0
    %v168 = vadd.f32 %v68, %v167
    %169 = vdwg.mxu0
    %170 = vmatprep.subr.mxu0 %v88
    %171 = vmatpush1.msra.mxu0 %v85
    %172 = vmatprep.subr.mxu0 0.0
    %173 = vmatpush1.msra.mxu0 0.0
    %174 = vmatprep.subr.mxu0 0.0
    %175 = vmatpush1.msra.mxu0 0.0
    %176 = vmatprep.subr.mxu0 0.0
    %177 = vmatpush1.msra.mxu0 0.0
    %178 = vmatprep.subr.mxu0 0.0
    %179 = vmatpush1.msra.mxu0 0.0
    %180 = vmatprep.subr.mxu0 0.0
    %181 = vmatpush1.msra.mxu0 0.0
    %182 = vmatprep.subr.mxu0 0.0
    %183 = vmatpush1.msra.mxu0 0.0
    %184 = vmatprep.subr.mxu0 0.0
    %185 = vmatpush1.msra.mxu0 0.0
    %186 = vmatprep.subr.mxu0 0.0
    %187 = vmatpush1.msra.mxu0 0.0
    %188 = vmatprep.subr.mxu0 0.0
    %189 = vmatpush1.msra.mxu0 0.0
    %190 = vmatprep.subr.mxu0 0.0
    %191 = vmatpush1.msra.mxu0 0.0
    %192 = vmatprep.subr.mxu0 0.0
    %193 = vmatpush1.msra.mxu0 0.0
    %194 = vmatprep.subr.mxu0 0.0
    %195 = vmatpush1.msra.mxu0 0.0
    %196 = vmatprep.subr.mxu0 0.0
    %197 = vmatpush1.msra.mxu0 0.0
    %198 = vmatprep.subr.mxu0 0.0
    %199 = vmatpush1.msra.mxu0 0.0
    %200 = vmatprep.subr.mxu0 0.0
    %201 = vmatpush1.msra.mxu0 0.0
    %202 = vmatprep.subr.mxu0 0.0
    %203 = vmatpush1.msra.mxu0 0.0
    %204 = vmatprep.subr.mxu0 0.0
    %205 = vmatpush1.msra.mxu0 0.0
    %206 = vmatprep.subr.mxu0 0.0
    %207 = vmatpush1.msra.mxu0 0.0
    %208 = vmatprep.subr.mxu0 0.0
    %209 = vmatpush1.msra.mxu0 0.0
    %210 = vmatprep.subr.mxu0 0.0
    %211 = vmatpush1.msra.mxu0 0.0
    %212 = vmatprep.subr.mxu0 0.0
    %213 = vmatpush1.msra.mxu0 0.0
    %214 = vmatprep.subr.mxu0 0.0
    %215 = vmatpush1.msra.mxu0 0.0
    %216 = vmatprep.subr.mxu0 0.0
    %217 = vmatpush1.msra.mxu0 0.0
    %218 = vmatprep.subr.mxu0 0.0
    %219 = vmatpush1.msra.mxu0 0.0
    %220 = vmatprep.subr.mxu0 0.0
    %221 = vmatpush1.msra.mxu0 0.0
    %222 = vmatprep.subr.mxu0 0.0
    %223 = vmatpush1.msra.mxu0 0.0
    %224 = vmatprep.subr.mxu0 0.0
    %225 = vmatpush1.msra.mxu0 0.0
    %226 = vmatprep.subr.mxu0 0.0
    %227 = vmatpush1.msra.mxu0 0.0
    %228 = vmatprep.subr.mxu0 0.0
    %229 = vmatpush1.msra.mxu0 0.0
    %230 = vmatprep.subr.mxu0 0.0
    %231 = vmatpush1.msra.mxu0 0.0
    %232 = vmatprep.subr.mxu0 0.0
    %233 = vmatpush1.msra.mxu0 0.0
    %234 = vmatprep.mubr.f32.mxu0 0.0
    %235 = vmatmul.mubr.f32.gmra.mrb[0].mxu0 %v72
    %v236 = vpop.f32.mrb[0].mxu0
    %v237 = vadd.f32 %v63, %v236
    %v238 = vpop.f32.mrb[0].mxu0
    %v239 = vadd.f32 %v63, %v238
    %240 = vmatprep.mubr.f32.mxu0 0.0
    %241 = vmatmul.mubr.f32.gmra.mrb[0].mxu0 %v75
    %v242 = vpop.f32.mrb[0].mxu0
    %v243 = vadd.f32 %v68, %v242
    %v244 = vpop.f32.mrb[0].mxu0
    %v245 = vadd.f32 %v68, %v244
    %246 = vdwg.mxu0
    %247 = vmatprep.subr.mxu0 0.0
    %248 = vmatpush1.msra.mxu0 %v91
    %249 = vmatprep.subr.mxu0 0.0
    %250 = vmatpush1.msra.mxu0 0.0
    %251 = vmatprep.subr.mxu0 0.0
    %252 = vmatpush1.msra.mxu0 0.0
    %253 = vmatprep.subr.mxu0 0.0
    %254 = vmatpush1.msra.mxu0 0.0
    %255 = vmatprep.subr.mxu0 0.0
    %256 = vmatpush1.msra.mxu0 0.0
    %257 = vmatprep.subr.mxu0 0.0
    %258 = vmatpush1.msra.mxu0 0.0
    %259 = vmatprep.subr.mxu0 0.0
    %260 = vmatpush1.msra.mxu0 0.0
    %261 = vmatprep.subr.mxu0 0.0
    %262 = vmatpush1.msra.mxu0 0.0
    %263 = vmatprep.subr.mxu0 0.0
    %264 = vmatpush1.msra.mxu0 0.0
    %265 = vmatprep.subr.mxu0 0.0
    %266 = vmatpush1.msra.mxu0 0.0
    %267 = vmatprep.subr.mxu0 0.0
    %268 = vmatpush1.msra.mxu0 0.0
    %269 = vmatprep.subr.mxu0 0.0
    %270 = vmatpush1.msra.mxu0 0.0
    %271 = vmatprep.subr.mxu0 0.0
    %272 = vmatpush1.msra.mxu0 0.0
    %273 = vmatprep.subr.mxu0 0.0
    %274 = vmatpush1.msra.mxu0 0.0
    %275 = vmatprep.subr.mxu0 0.0
    %276 = vmatpush1.msra.mxu0 0.0
    %277 = vmatprep.subr.mxu0 0.0
    %278 = vmatpush1.msra.mxu0 0.0
    %279 = vmatprep.subr.mxu0 0.0
    %280 = vmatpush1.msra.mxu0 0.0
    %281 = vmatprep.subr.mxu0 0.0
    %282 = vmatpush1.msra.mxu0 0.0
    %283 = vmatprep.subr.mxu0 0.0
    %284 = vmatpush1.msra.mxu0 0.0
    %285 = vmatprep.subr.mxu0 0.0
    %286 = vmatpush1.msra.mxu0 0.0
    %287 = vmatprep.subr.mxu0 0.0
    %288 = vmatpush1.msra.mxu0 0.0
    %289 = vmatprep.subr.mxu0 0.0
    %290 = vmatpush1.msra.mxu0 0.0
    %291 = vmatprep.subr.mxu0 0.0
    %292 = vmatpush1.msra.mxu0 0.0
    %293 = vmatprep.subr.mxu0 0.0
    %294 = vmatpush1.msra.mxu0 0.0
    %295 = vmatprep.subr.mxu0 0.0
    %296 = vmatpush1.msra.mxu0 0.0
    %297 = vmatprep.subr.mxu0 0.0
    %298 = vmatpush1.msra.mxu0 0.0
    %299 = vmatprep.subr.mxu0 0.0
    %300 = vmatpush1.msra.mxu0 0.0
    %301 = vmatprep.subr.mxu0 0.0
    %302 = vmatpush1.msra.mxu0 0.0
    %303 = vmatprep.subr.mxu0 0.0
    %304 = vmatpush1.msra.mxu0 0.0
    %305 = vmatprep.subr.mxu0 0.0
    %306 = vmatpush1.msra.mxu0 0.0
    %307 = vmatprep.subr.mxu0 0.0
    %308 = vmatpush1.msra.mxu0 0.0
    %309 = vmatprep.subr.mxu0 0.0
    %310 = vmatpush1.msra.mxu0 0.0
    %311 = vmatprep.mubr.f32.mxu0 0.0
    %312 = vmatmul.mubr.f32.gmra.mrb[0].mxu0 %v72
    %v313 = vpop.f32.mrb[0].mxu0
    %v314 = vadd.f32 %v63, %v313
    %v315 = vpop.f32.mrb[0].mxu0
    %316 = vmatprep.mubr.f32.mxu0 0.0
    %317 = vmatmul.mubr.f32.gmra.mrb[0].mxu0 %v75
    %v318 = vpop.f32.mrb[0].mxu0
    %v319 = vadd.f32 %v68, %v318
    %v320 = vpop.f32.mrb[0].mxu0
    %321 = vdwg.mxu0
    %v322 = vtanh.pop %v160
    %v323 = vtanh.pop %v162
    %v324 = vtanh.pop %v237
    %v325 = vtanh.pop %v239
    %v326 = vtanh.pop %v314
    %v327 = vtanh.pop %v166
    %v328 = vtanh.pop %v168
    %v329 = vtanh.pop %v243
    %v330 = vtanh.pop %v245
    %v331 = vtanh.pop %v319
    %v332 = vld [vmem:[%s3] sm:$0xff]
    %v333 = vld [vmem:[%s3 + $0x8] sm:$0xff]
    %v334 = vld [vmem:[%s3 + $0x10] sm:$0xff]
    %v335 = vld [vmem:[%s3 + $0x18] sm:$0xff]
    %v336 = vld [vmem:[%s4] sm:$0xff]
    %v337 = vld [vmem:[%s4 + $0x8] sm:$0xff]
    %v338 = vld [vmem:[%s4 + $0x10] sm:$0xff]
    %v339 = vld [vmem:[%s4 + $0x18] sm:$0xff]
    %341 = vset.pattern.permute.xlu0 0
    %342 = vperm.xlu0 %341, %v336
    %v343 = vpop.permute.xlu0 %342
    %346 = vset.pattern.permute.xlu0 0
    %347 = vperm.xlu0 %346, %v337
    %v348 = vpop.permute.xlu0 %347
    %351 = vset.pattern.permute.xlu0 0
    %352 = vperm.xlu0 %351, %v338
    %v353 = vpop.permute.xlu0 %352
    %356 = vset.pattern.permute.xlu0 0
    %357 = vperm.xlu0 %356, %v339
    %v358 = vpop.permute.xlu0 %357
    %vm360 = vcmask 130048
    %v362 = vsel %vm360, %v332, 0
    %v365 = vsel %vm360, %v333, 0
    %v368 = vsel %vm360, %v334, 0
    %v371 = vsel %vm360, %v335, 0
    %373 = vmatprep.subr.mxu0 %v323
    %374 = vmatpush1.msra.mxu0 %v322
    %375 = vmatprep.subr.mxu0 %v328
    %376 = vmatpush1.msra.mxu0 %v327
    %377 = vmatprep.subr.mxu0 0.0
    %378 = vmatpush1.msra.mxu0 0.0
    %379 = vmatprep.subr.mxu0 0.0
    %380 = vmatpush1.msra.mxu0 0.0
    %381 = vmatprep.subr.mxu0 0.0
    %382 = vmatpush1.msra.mxu0 0.0
    %383 = vmatprep.subr.mxu0 0.0
    %384 = vmatpush1.msra.mxu0 0.0
    %385 = vmatprep.subr.mxu0 0.0
    %386 = vmatpush1.msra.mxu0 0.0
    %387 = vmatprep.subr.mxu0 0.0
    %388 = vmatpush1.msra.mxu0 0.0
    %389 = vmatprep.subr.mxu0 0.0
    %390 = vmatpush1.msra.mxu0 0.0
    %391 = vmatprep.subr.mxu0 0.0
    %392 = vmatpush1.msra.mxu0 0.0
    %393 = vmatprep.subr.mxu0 0.0
    %394 = vmatpush1.msra.mxu0 0.0
    %395 = vmatprep.subr.mxu0 0.0
    %396 = vmatpush1.msra.mxu0 0.0
    %397 = vmatprep.subr.mxu0 0.0
    %398 = vmatpush1.msra.mxu0 0.0
    %399 = vmatprep.subr.mxu0 0.0
    %400 = vmatpush1.msra.mxu0 0.0
    %401 = vmatprep.subr.mxu0 0.0
    %402 = vmatpush1.msra.mxu0 0.0
    %403 = vmatprep.subr.mxu0 0.0
    %404 = vmatpush1.msra.mxu0 0.0
    %405 = vmatprep.subr.mxu0 0.0
    %406 = vmatpush1.msra.mxu0 0.0
    %407 = vmatprep.subr.mxu0 0.0
    %408 = vmatpush1.msra.mxu0 0.0
    %409 = vmatprep.subr.mxu0 0.0
    %410 = vmatpush1.msra.mxu0 0.0
    %411 = vmatprep.subr.mxu0 0.0
    %412 = vmatpush1.msra.mxu0 0.0
    %413 = vmatprep.subr.mxu0 0.0
    %414 = vmatpush1.msra.mxu0 0.0
    %415 = vmatprep.subr.mxu0 0.0
    %416 = vmatpush1.msra.mxu0 0.0
    %417 = vmatprep.subr.mxu0 0.0
    %418 = vmatpush1.msra.mxu0 0.0
    %419 = vmatprep.subr.mxu0 0.0
    %420 = vmatpush1.msra.mxu0 0.0
    %421 = vmatprep.subr.mxu0 0.0
    %422 = vmatpush1.msra.mxu0 0.0
    %423 = vmatprep.subr.mxu0 0.0
    %424 = vmatpush1.msra.mxu0 0.0
    %425 = vmatprep.subr.mxu0 0.0
    %426 = vmatpush1.msra.mxu0 0.0
    %427 = vmatprep.subr.mxu0 0.0
    %428 = vmatpush1.msra.mxu0 0.0
    %429 = vmatprep.subr.mxu0 0.0
    %430 = vmatpush1.msra.mxu0 0.0
    %431 = vmatprep.subr.mxu0 0.0
    %432 = vmatpush1.msra.mxu0 0.0
    %433 = vmatprep.subr.mxu0 0.0
    %434 = vmatpush1.msra.mxu0 0.0
    %435 = vmatprep.subr.mxu0 0.0
    %436 = vmatpush1.msra.mxu0 0.0
    %437 = vmatprep.mubr.f32.mxu0 0.0
    %438 = vmatmul.mubr.f32.gmra.mrb[0].mxu0 %v362
    %v439 = vpop.f32.mrb[0].mxu0
    %v440 = vadd.f32 %v343, %v439
    %v441 = vpop.f32.mrb[0].mxu0
    %v442 = vadd.f32 %v343, %v441
    %443 = vmatprep.mubr.f32.mxu0 0.0
    %444 = vmatmul.mubr.f32.gmra.mrb[0].mxu0 %v365
    %v445 = vpop.f32.mrb[0].mxu0
    %v446 = vadd.f32 %v348, %v445
    %v447 = vpop.f32.mrb[0].mxu0
    %v448 = vadd.f32 %v348, %v447
    %449 = vmatprep.mubr.f32.mxu0 0.0
    %450 = vmatmul.mubr.f32.gmra.mrb[0].mxu0 %v368
    %v451 = vpop.f32.mrb[0].mxu0
    %v452 = vadd.f32 %v353, %v451
    %v453 = vpop.f32.mrb[0].mxu0
    %v454 = vadd.f32 %v353, %v453
    %455 = vmatprep.mubr.f32.mxu0 0.0
    %456 = vmatmul.mubr.f32.gmra.mrb[0].mxu0 %v371
    %v457 = vpop.f32.mrb[0].mxu0
    %v458 = vadd.f32 %v358, %v457
    %v459 = vpop.f32.mrb[0].mxu0
    %v460 = vadd.f32 %v358, %v459
    %461 = vdwg.mxu0
    %462 = vmatprep.subr.mxu0 %v325
    %463 = vmatpush1.msra.mxu0 %v324
    %464 = vmatprep.subr.mxu0 %v330
    %465 = vmatpush1.msra.mxu0 %v329
    %466 = vmatprep.subr.mxu0 0.0
    %467 = vmatpush1.msra.mxu0 0.0
    %468 = vmatprep.subr.mxu0 0.0
    %469 = vmatpush1.msra.mxu0 0.0
    %470 = vmatprep.subr.mxu0 0.0
    %471 = vmatpush1.msra.mxu0 0.0
    %472 = vmatprep.subr.mxu0 0.0
    %473 = vmatpush1.msra.mxu0 0.0
    %474 = vmatprep.subr.mxu0 0.0
    %475 = vmatpush1.msra.mxu0 0.0
    %476 = vmatprep.subr.mxu0 0.0
    %477 = vmatpush1.msra.mxu0 0.0
    %478 = vmatprep.subr.mxu0 0.0
    %479 = vmatpush1.msra.mxu0 0.0
    %480 = vmatprep.subr.mxu0 0.0
    %481 = vmatpush1.msra.mxu0 0.0
    %482 = vmatprep.subr.mxu0 0.0
    %483 = vmatpush1.msra.mxu0 0.0
    %484 = vmatprep.subr.mxu0 0.0
    %485 = vmatpush1.msra.mxu0 0.0
    %486 = vmatprep.subr.mxu0 0.0
    %487 = vmatpush1.msra.mxu0 0.0
    %488 = vmatprep.subr.mxu0 0.0
    %489 = vmatpush1.msra.mxu0 0.0
    %490 = vmatprep.subr.mxu0 0.0
    %491 = vmatpush1.msra.mxu0 0.0
    %492 = vmatprep.subr.mxu0 0.0
    %493 = vmatpush1.msra.mxu0 0.0
    %494 = vmatprep.subr.mxu0 0.0
    %495 = vmatpush1.msra.mxu0 0.0
    %496 = vmatprep.subr.mxu0 0.0
    %497 = vmatpush1.msra.mxu0 0.0
    %498 = vmatprep.subr.mxu0 0.0
    %499 = vmatpush1.msra.mxu0 0.0
    %500 = vmatprep.subr.mxu0 0.0
    %501 = vmatpush1.msra.mxu0 0.0
    %502 = vmatprep.subr.mxu0 0.0
    %503 = vmatpush1.msra.mxu0 0.0
    %504 = vmatprep.subr.mxu0 0.0
    %505 = vmatpush1.msra.mxu0 0.0
    %506 = vmatprep.subr.mxu0 0.0
    %507 = vmatpush1.msra.mxu0 0.0
    %508 = vmatprep.subr.mxu0 0.0
    %509 = vmatpush1.msra.mxu0 0.0
    %510 = vmatprep.subr.mxu0 0.0
    %511 = vmatpush1.msra.mxu0 0.0
    %512 = vmatprep.subr.mxu0 0.0
    %513 = vmatpush1.msra.mxu0 0.0
    %514 = vmatprep.subr.mxu0 0.0
    %515 = vmatpush1.msra.mxu0 0.0
    %516 = vmatprep.subr.mxu0 0.0
    %517 = vmatpush1.msra.mxu0 0.0
    %518 = vmatprep.subr.mxu0 0.0
    %519 = vmatpush1.msra.mxu0 0.0
    %520 = vmatprep.subr.mxu0 0.0
    %521 = vmatpush1.msra.mxu0 0.0
    %522 = vmatprep.subr.mxu0 0.0
    %523 = vmatpush1.msra.mxu0 0.0
    %524 = vmatprep.subr.mxu0 0.0
    %525 = vmatpush1.msra.mxu0 0.0
    %526 = vmatprep.mubr.f32.mxu0 0.0
    %527 = vmatmul.mubr.f32.gmra.mrb[0].mxu0 %v362
    %v528 = vpop.f32.mrb[0].mxu0
    %v529 = vadd.f32 %v343, %v528
    %v530 = vpop.f32.mrb[0].mxu0
    %v531 = vadd.f32 %v343, %v530
    %532 = vmatprep.mubr.f32.mxu0 0.0
    %533 = vmatmul.mubr.f32.gmra.mrb[0].mxu0 %v365
    %v534 = vpop.f32.mrb[0].mxu0
    %v535 = vadd.f32 %v348, %v534
    %v536 = vpop.f32.mrb[0].mxu0
    %v537 = vadd.f32 %v348, %v536
    %538 = vmatprep.mubr.f32.mxu0 0.0
    %539 = vmatmul.mubr.f32.gmra.mrb[0].mxu0 %v368
    %v540 = vpop.f32.mrb[0].mxu0
    %v541 = vadd.f32 %v353, %v540
    %v542 = vpop.f32.mrb[0].mxu0
    %v543 = vadd.f32 %v353, %v542
    %544 = vmatprep.mubr.f32.mxu0 0.0
    %545 = vmatmul.mubr.f32.gmra.mrb[0].mxu0 %v371
    %v546 = vpop.f32.mrb[0].mxu0
    %v547 = vadd.f32 %v358, %v546
    %v548 = vpop.f32.mrb[0].mxu0
    %v549 = vadd.f32 %v358, %v548
    %550 = vdwg.mxu0
    %551 = vmatprep.subr.mxu0 0.0
    %552 = vmatpush1.msra.mxu0 %v326
    %553 = vmatprep.subr.mxu0 0.0
    %554 = vmatpush1.msra.mxu0 %v331
    %555 = vmatprep.subr.mxu0 0.0
    %556 = vmatpush1.msra.mxu0 0.0
    %557 = vmatprep.subr.mxu0 0.0
    %558 = vmatpush1.msra.mxu0 0.0
    %559 = vmatprep.subr.mxu0 0.0
    %560 = vmatpush1.msra.mxu0 0.0
    %561 = vmatprep.subr.mxu0 0.0
    %562 = vmatpush1.msra.mxu0 0.0
    %563 = vmatprep.subr.mxu0 0.0
    %564 = vmatpush1.msra.mxu0 0.0
    %565 = vmatprep.subr.mxu0 0.0
    %566 = vmatpush1.msra.mxu0 0.0
    %567 = vmatprep.subr.mxu0 0.0
    %568 = vmatpush1.msra.mxu0 0.0
    %569 = vmatprep.subr.mxu0 0.0
    %570 = vmatpush1.msra.mxu0 0.0
    %571 = vmatprep.subr.mxu0 0.0
    %572 = vmatpush1.msra.mxu0 0.0
    %573 = vmatprep.subr.mxu0 0.0
    %574 = vmatpush1.msra.mxu0 0.0
    %575 = vmatprep.subr.mxu0 0.0
    %576 = vmatpush1.msra.mxu0 0.0
    %577 = vmatprep.subr.mxu0 0.0
    %578 = vmatpush1.msra.mxu0 0.0
    %579 = vmatprep.subr.mxu0 0.0
    %580 = vmatpush1.msra.mxu0 0.0
    %581 = vmatprep.subr.mxu0 0.0
    %582 = vmatpush1.msra.mxu0 0.0
    %583 = vmatprep.subr.mxu0 0.0
    %584 = vmatpush1.msra.mxu0 0.0
    %585 = vmatprep.subr.mxu0 0.0
    %586 = vmatpush1.msra.mxu0 0.0
    %587 = vmatprep.subr.mxu0 0.0
    %588 = vmatpush1.msra.mxu0 0.0
    %589 = vmatprep.subr.mxu0 0.0
    %590 = vmatpush1.msra.mxu0 0.0
    %591 = vmatprep.subr.mxu0 0.0
    %592 = vmatpush1.msra.mxu0 0.0
    %593 = vmatprep.subr.mxu0 0.0
    %594 = vmatpush1.msra.mxu0 0.0
    %595 = vmatprep.subr.mxu0 0.0
    %596 = vmatpush1.msra.mxu0 0.0
    %597 = vmatprep.subr.mxu0 0.0
    %598 = vmatpush1.msra.mxu0 0.0
    %599 = vmatprep.subr.mxu0 0.0
    %600 = vmatpush1.msra.mxu0 0.0
    %601 = vmatprep.subr.mxu0 0.0
    %602 = vmatpush1.msra.mxu0 0.0
    %603 = vmatprep.subr.mxu0 0.0
    %604 = vmatpush1.msra.mxu0 0.0
    %605 = vmatprep.subr.mxu0 0.0
    %606 = vmatpush1.msra.mxu0 0.0
    %607 = vmatprep.subr.mxu0 0.0
    %608 = vmatpush1.msra.mxu0 0.0
    %609 = vmatprep.subr.mxu0 0.0
    %610 = vmatpush1.msra.mxu0 0.0
    %611 = vmatprep.subr.mxu0 0.0
    %612 = vmatpush1.msra.mxu0 0.0
    %613 = vmatprep.subr.mxu0 0.0
    %614 = vmatpush1.msra.mxu0 0.0
    %615 = vmatprep.mubr.f32.mxu0 0.0
    %616 = vmatmul.mubr.f32.gmra.mrb[0].mxu0 %v362
    %v617 = vpop.f32.mrb[0].mxu0
    %v618 = vadd.f32 %v343, %v617
    %v619 = vpop.f32.mrb[0].mxu0
    %620 = vmatprep.mubr.f32.mxu0 0.0
    %621 = vmatmul.mubr.f32.gmra.mrb[0].mxu0 %v365
    %v622 = vpop.f32.mrb[0].mxu0
    %v623 = vadd.f32 %v348, %v622
    %v624 = vpop.f32.mrb[0].mxu0
    %625 = vmatprep.mubr.f32.mxu0 0.0
    %626 = vmatmul.mubr.f32.gmra.mrb[0].mxu0 %v368
    %v627 = vpop.f32.mrb[0].mxu0
    %v628 = vadd.f32 %v353, %v627
    %v629 = vpop.f32.mrb[0].mxu0
    %630 = vmatprep.mubr.f32.mxu0 0.0
    %631 = vmatmul.mubr.f32.gmra.mrb[0].mxu0 %v371
    %v632 = vpop.f32.mrb[0].mxu0
    %v633 = vadd.f32 %v358, %v632
    %v634 = vpop.f32.mrb[0].mxu0
    %635 = vdwg.mxu0
    %v636 = vtanh.pop %v440
    %v637 = vtanh.pop %v442
    %v638 = vtanh.pop %v529
    %v639 = vtanh.pop %v531
    %v640 = vtanh.pop %v618
    %v641 = vtanh.pop %v446
    %v642 = vtanh.pop %v448
    %v643 = vtanh.pop %v535
    %v644 = vtanh.pop %v537
    %v645 = vtanh.pop %v623
    %v646 = vtanh.pop %v452
    %v647 = vtanh.pop %v454
    %v648 = vtanh.pop %v541
    %v649 = vtanh.pop %v543
    %v650 = vtanh.pop %v628
    %v651 = vtanh.pop %v458
    %v652 = vtanh.pop %v460
    %v653 = vtanh.pop %v547
    %v654 = vtanh.pop %v549
    %v655 = vtanh.pop %v633
    %v656 = vld [vmem:[%s5] sm:$0xff]
    %v657 = vld [vmem:[%s5 + $0x8] sm:$0xff]
    %v658 = vld [vmem:[%s5 + $0x10] sm:$0xff]
    %v659 = vld [vmem:[%s5 + $0x18] sm:$0xff]
    %v660 = vld [vmem:[%s5 + $0x20] sm:$0xff]
    %v661 = vld [vmem:[%s5 + $0x28] sm:$0xff]
    %v662 = vld [vmem:[%s5 + $0x30] sm:$0xff]
    %v663 = vld [vmem:[%s5 + $0x38] sm:$0xff]
    %v664 = vld [vmem:[%s6] sm:$0xff]
    %v665 = vld [vmem:[%s6 + $0x8] sm:$0xff]
    %v666 = vld [vmem:[%s6 + $0x10] sm:$0xff]
    %v667 = vld [vmem:[%s6 + $0x18] sm:$0xff]
    %v668 = vld [vmem:[%s6 + $0x20] sm:$0xff]
    %v669 = vld [vmem:[%s6 + $0x28] sm:$0xff]
    %v670 = vld [vmem:[%s6 + $0x30] sm:$0xff]
    %v671 = vld [vmem:[%s6 + $0x38] sm:$0xff]
    %673 = vset.pattern.permute.xlu0 0
    %674 = vperm.xlu0 %673, %v664
    %v675 = vpop.permute.xlu0 %674
    %678 = vset.pattern.permute.xlu0 0
    %679 = vperm.xlu0 %678, %v665
    %v680 = vpop.permute.xlu0 %679
    %683 = vset.pattern.permute.xlu0 0
    %684 = vperm.xlu0 %683, %v666
    %v685 = vpop.permute.xlu0 %684
    %688 = vset.pattern.permute.xlu0 0
    %689 = vperm.xlu0 %688, %v667
    %v690 = vpop.permute.xlu0 %689
    %693 = vset.pattern.permute.xlu0 0
    %694 = vperm.xlu0 %693, %v668
    %v695 = vpop.permute.xlu0 %694
    %698 = vset.pattern.permute.xlu0 0
    %699 = vperm.xlu0 %698, %v669
    %v700 = vpop.permute.xlu0 %699
    %703 = vset.pattern.permute.xlu0 0
    %704 = vperm.xlu0 %703, %v670
    %v705 = vpop.permute.xlu0 %704
    %708 = vset.pattern.permute.xlu0 0
    %709 = vperm.xlu0 %708, %v671
    %v710 = vpop.permute.xlu0 %709
    %vm712 = vcmask 261120
    %v714 = vsel %vm712, %v656, 0
    %v717 = vsel %vm712, %v657, 0
    %v720 = vsel %vm712, %v658, 0
    %v723 = vsel %vm712, %v659, 0
    %v726 = vsel %vm712, %v660, 0
    %v729 = vsel %vm712, %v661, 0
    %v732 = vsel %vm712, %v662, 0
    %v735 = vsel %vm712, %v663, 0
    %737 = vmatprep.subr.mxu0 %v637
    %738 = vmatpush1.msra.mxu0 %v636
    %739 = vmatprep.subr.mxu0 %v642
    %740 = vmatpush1.msra.mxu0 %v641
    %741 = vmatprep.subr.mxu0 %v647
    %742 = vmatpush1.msra.mxu0 %v646
    %743 = vmatprep.subr.mxu0 %v652
    %744 = vmatpush1.msra.mxu0 %v651
    %745 = vmatprep.subr.mxu0 0.0
    %746 = vmatpush1.msra.mxu0 0.0
    %747 = vmatprep.subr.mxu0 0.0
    %748 = vmatpush1.msra.mxu0 0.0
    %749 = vmatprep.subr.mxu0 0.0
    %750 = vmatpush1.msra.mxu0 0.0
    %751 = vmatprep.subr.mxu0 0.0
    %752 = vmatpush1.msra.mxu0 0.0
    %753 = vmatprep.subr.mxu0 0.0
    %754 = vmatpush1.msra.mxu0 0.0
    %755 = vmatprep.subr.mxu0 0.0
    %756 = vmatpush1.msra.mxu0 0.0
    %757 = vmatprep.subr.mxu0 0.0
    %758 = vmatpush1.msra.mxu0 0.0
    %759 = vmatprep.subr.mxu0 0.0
    %760 = vmatpush1.msra.mxu0 0.0
    %761 = vmatprep.subr.mxu0 0.0
    %762 = vmatpush1.msra.mxu0 0.0
    %763 = vmatprep.subr.mxu0 0.0
    %764 = vmatpush1.msra.mxu0 0.0
    %765 = vmatprep.subr.mxu0 0.0
    %766 = vmatpush1.msra.mxu0 0.0
    %767 = vmatprep.subr.mxu0 0.0
    %768 = vmatpush1.msra.mxu0 0.0
    %769 = vmatprep.subr.mxu0 0.0
    %770 = vmatpush1.msra.mxu0 0.0
    %771 = vmatprep.subr.mxu0 0.0
    %772 = vmatpush1.msra.mxu0 0.0
    %773 = vmatprep.subr.mxu0 0.0
    %774 = vmatpush1.msra.mxu0 0.0
    %775 = vmatprep.subr.mxu0 0.0
    %776 = vmatpush1.msra.mxu0 0.0
    %777 = vmatprep.subr.mxu0 0.0
    %778 = vmatpush1.msra.mxu0 0.0
    %779 = vmatprep.subr.mxu0 0.0
    %780 = vmatpush1.msra.mxu0 0.0
    %781 = vmatprep.subr.mxu0 0.0
    %782 = vmatpush1.msra.mxu0 0.0
    %783 = vmatprep.subr.mxu0 0.0
    %784 = vmatpush1.msra.mxu0 0.0
    %785 = vmatprep.subr.mxu0 0.0
    %786 = vmatpush1.msra.mxu0 0.0
    %787 = vmatprep.subr.mxu0 0.0
    %788 = vmatpush1.msra.mxu0 0.0
    %789 = vmatprep.subr.mxu0 0.0
    %790 = vmatpush1.msra.mxu0 0.0
    %791 = vmatprep.subr.mxu0 0.0
    %792 = vmatpush1.msra.mxu0 0.0
    %793 = vmatprep.subr.mxu0 0.0
    %794 = vmatpush1.msra.mxu0 0.0
    %795 = vmatprep.subr.mxu0 0.0
    %796 = vmatpush1.msra.mxu0 0.0
    %797 = vmatprep.subr.mxu0 0.0
    %798 = vmatpush1.msra.mxu0 0.0
    %799 = vmatprep.subr.mxu0 0.0
    %800 = vmatpush1.msra.mxu0 0.0
    %801 = vmatprep.mubr.f32.mxu0 0.0
    %802 = vmatmul.mubr.f32.gmra.mrb[0].mxu0 %v714
    %v803 = vpop.f32.mrb[0].mxu0
    %v804 = vadd.f32 %v675, %v803
    %v805 = vpop.f32.mrb[0].mxu0
    %v806 = vadd.f32 %v675, %v805
    %807 = vmatprep.mubr.f32.mxu0 0.0
    %808 = vmatmul.mubr.f32.gmra.mrb[0].mxu0 %v717
    %v809 = vpop.f32.mrb[0].mxu0
    %v810 = vadd.f32 %v680, %v809
    %v811 = vpop.f32.mrb[0].mxu0
    %v812 = vadd.f32 %v680, %v811
    %813 = vmatprep.mubr.f32.mxu0 0.0
    %814 = vmatmul.mubr.f32.gmra.mrb[0].mxu0 %v720
    %v815 = vpop.f32.mrb[0].mxu0
    %v816 = vadd.f32 %v685, %v815
    %v817 = vpop.f32.mrb[0].mxu0
    %v818 = vadd.f32 %v685, %v817
    %819 = vmatprep.mubr.f32.mxu0 0.0
    %820 = vmatmul.mubr.f32.gmra.mrb[0].mxu0 %v723
    %v821 = vpop.f32.mrb[0].mxu0
    %v822 = vadd.f32 %v690, %v821
    %v823 = vpop.f32.mrb[0].mxu0
    %v824 = vadd.f32 %v690, %v823
    %825 = vmatprep.mubr.f32.mxu0 0.0
    %826 = vmatmul.mubr.f32.gmra.mrb[0].mxu0 %v726
    %v827 = vpop.f32.mrb[0].mxu0
    %v828 = vadd.f32 %v695, %v827
    %v829 = vpop.f32.mrb[0].mxu0
    %v830 = vadd.f32 %v695, %v829
    %831 = vmatprep.mubr.f32.mxu0 0.0
    %832 = vmatmul.mubr.f32.gmra.mrb[0].mxu0 %v729
    %v833 = vpop.f32.mrb[0].mxu0
    %v834 = vadd.f32 %v700, %v833
    %v835 = vpop.f32.mrb[0].mxu0
    %v836 = vadd.f32 %v700, %v835
    %837 = vmatprep.mubr.f32.mxu0 0.0
    %838 = vmatmul.mubr.f32.gmra.mrb[0].mxu0 %v732
    %v839 = vpop.f32.mrb[0].mxu0
    %v840 = vadd.f32 %v705, %v839
    %v841 = vpop.f32.mrb[0].mxu0
    %v842 = vadd.f32 %v705, %v841
    %843 = vmatprep.mubr.f32.mxu0 0.0
    %844 = vmatmul.mubr.f32.gmra.mrb[0].mxu0 %v735
    %v845 = vpop.f32.mrb[0].mxu0
    %v846 = vadd.f32 %v710, %v845
    %v847 = vpop.f32.mrb[0].mxu0
    %v848 = vadd.f32 %v710, %v847
    %849 = vdwg.mxu0
    %850 = vmatprep.subr.mxu0 %v639
    %851 = vmatpush1.msra.mxu0 %v638
    %852 = vmatprep.subr.mxu0 %v644
    %853 = vmatpush1.msra.mxu0 %v643
    %854 = vmatprep.subr.mxu0 %v649
    %855 = vmatpush1.msra.mxu0 %v648
    %856 = vmatprep.subr.mxu0 %v654
    %857 = vmatpush1.msra.mxu0 %v653
    %858 = vmatprep.subr.mxu0 0.0
    %859 = vmatpush1.msra.mxu0 0.0
    %860 = vmatprep.subr.mxu0 0.0
    %861 = vmatpush1.msra.mxu0 0.0
    %862 = vmatprep.subr.mxu0 0.0
    %863 = vmatpush1.msra.mxu0 0.0
    %864 = vmatprep.subr.mxu0 0.0
    %865 = vmatpush1.msra.mxu0 0.0
    %866 = vmatprep.subr.mxu0 0.0
    %867 = vmatpush1.msra.mxu0 0.0
    %868 = vmatprep.subr.mxu0 0.0
    %869 = vmatpush1.msra.mxu0 0.0
    %870 = vmatprep.subr.mxu0 0.0
    %871 = vmatpush1.msra.mxu0 0.0
    %872 = vmatprep.subr.mxu0 0.0
    %873 = vmatpush1.msra.mxu0 0.0
    %874 = vmatprep.subr.mxu0 0.0
    %875 = vmatpush1.msra.mxu0 0.0
    %876 = vmatprep.subr.mxu0 0.0
    %877 = vmatpush1.msra.mxu0 0.0
    %878 = vmatprep.subr.mxu0 0.0
    %879 = vmatpush1.msra.mxu0 0.0
    %880 = vmatprep.subr.mxu0 0.0
    %881 = vmatpush1.msra.mxu0 0.0
    %882 = vmatprep.subr.mxu0 0.0
    %883 = vmatpush1.msra.mxu0 0.0
    %884 = vmatprep.subr.mxu0 0.0
    %885 = vmatpush1.msra.mxu0 0.0
    %886 = vmatprep.subr.mxu0 0.0
    %887 = vmatpush1.msra.mxu0 0.0
    %888 = vmatprep.subr.mxu0 0.0
    %889 = vmatpush1.msra.mxu0 0.0
    %890 = vmatprep.subr.mxu0 0.0
    %891 = vmatpush1.msra.mxu0 0.0
    %892 = vmatprep.subr.mxu0 0.0
    %893 = vmatpush1.msra.mxu0 0.0
    %894 = vmatprep.subr.mxu0 0.0
    %895 = vmatpush1.msra.mxu0 0.0
    %896 = vmatprep.subr.mxu0 0.0
    %897 = vmatpush1.msra.mxu0 0.0
    %898 = vmatprep.subr.mxu0 0.0
    %899 = vmatpush1.msra.mxu0 0.0
    %900 = vmatprep.subr.mxu0 0.0
    %901 = vmatpush1.msra.mxu0 0.0
    %902 = vmatprep.subr.mxu0 0.0
    %903 = vmatpush1.msra.mxu0 0.0
    %904 = vmatprep.subr.mxu0 0.0
    %905 = vmatpush1.msra.mxu0 0.0
    %906 = vmatprep.subr.mxu0 0.0
    %907 = vmatpush1.msra.mxu0 0.0
    %908 = vmatprep.subr.mxu0 0.0
    %909 = vmatpush1.msra.mxu0 0.0
    %910 = vmatprep.subr.mxu0 0.0
    %911 = vmatpush1.msra.mxu0 0.0
    %912 = vmatprep.subr.mxu0 0.0
    %913 = vmatpush1.msra.mxu0 0.0
    %914 = vmatprep.mubr.f32.mxu0 0.0
    %915 = vmatmul.mubr.f32.gmra.mrb[0].mxu0 %v714
    %v916 = vpop.f32.mrb[0].mxu0
    %v917 = vadd.f32 %v675, %v916
    %v918 = vpop.f32.mrb[0].mxu0
    %v919 = vadd.f32 %v675, %v918
    %920 = vmatprep.mubr.f32.mxu0 0.0
    %921 = vmatmul.mubr.f32.gmra.mrb[0].mxu0 %v717
    %v922 = vpop.f32.mrb[0].mxu0
    %v923 = vadd.f32 %v680, %v922
    %v924 = vpop.f32.mrb[0].mxu0
    %v925 = vadd.f32 %v680, %v924
    %926 = vmatprep.mubr.f32.mxu0 0.0
    %927 = vmatmul.mubr.f32.gmra.mrb[0].mxu0 %v720
    %v928 = vpop.f32.mrb[0].mxu0
    %v929 = vadd.f32 %v685, %v928
    %v930 = vpop.f32.mrb[0].mxu0
    %v931 = vadd.f32 %v685, %v930
    %932 = vmatprep.mubr.f32.mxu0 0.0
    %933 = vmatmul.mubr.f32.gmra.mrb[0].mxu0 %v723
    %v934 = vpop.f32.mrb[0].mxu0
    %v935 = vadd.f32 %v690, %v934
    %v936 = vpop.f32.mrb[0].mxu0
    %v937 = vadd.f32 %v690, %v936
    %938 = vmatprep.mubr.f32.mxu0 0.0
    %939 = vmatmul.mubr.f32.gmra.mrb[0].mxu0 %v726
    %v940 = vpop.f32.mrb[0].mxu0
    %v941 = vadd.f32 %v695, %v940
    %v942 = vpop.f32.mrb[0].mxu0
    %v943 = vadd.f32 %v695, %v942
    %944 = vmatprep.mubr.f32.mxu0 0.0
    %945 = vmatmul.mubr.f32.gmra.mrb[0].mxu0 %v729
    %v946 = vpop.f32.mrb[0].mxu0
    %v947 = vadd.f32 %v700, %v946
    %v948 = vpop.f32.mrb[0].mxu0
    %v949 = vadd.f32 %v700, %v948
    %950 = vmatprep.mubr.f32.mxu0 0.0
    %951 = vmatmul.mubr.f32.gmra.mrb[0].mxu0 %v732
    %v952 = vpop.f32.mrb[0].mxu0
    %v953 = vadd.f32 %v705, %v952
    %v954 = vpop.f32.mrb[0].mxu0
    %v955 = vadd.f32 %v705, %v954
    %956 = vmatprep.mubr.f32.mxu0 0.0
    %957 = vmatmul.mubr.f32.gmra.mrb[0].mxu0 %v735
    %v958 = vpop.f32.mrb[0].mxu0
    %v959 = vadd.f32 %v710, %v958
    %v960 = vpop.f32.mrb[0].mxu0
    %v961 = vadd.f32 %v710, %v960
    %962 = vdwg.mxu0
    %963 = vmatprep.subr.mxu0 0.0
    %964 = vmatpush1.msra.mxu0 %v640
    %965 = vmatprep.subr.mxu0 0.0
    %966 = vmatpush1.msra.mxu0 %v645
    %967 = vmatprep.subr.mxu0 0.0
    %968 = vmatpush1.msra.mxu0 %v650
    %969 = vmatprep.subr.mxu0 0.0
    %970 = vmatpush1.msra.mxu0 %v655
    %971 = vmatprep.subr.mxu0 0.0
    %972 = vmatpush1.msra.mxu0 0.0
    %973 = vmatprep.subr.mxu0 0.0
    %974 = vmatpush1.msra.mxu0 0.0
    %975 = vmatprep.subr.mxu0 0.0
    %976 = vmatpush1.msra.mxu0 0.0
    %977 = vmatprep.subr.mxu0 0.0
    %978 = vmatpush1.msra.mxu0 0.0
    %979 = vmatprep.subr.mxu0 0.0
    %980 = vmatpush1.msra.mxu0 0.0
    %981 = vmatprep.subr.mxu0 0.0
    %982 = vmatpush1.msra.mxu0 0.0
    %983 = vmatprep.subr.mxu0 0.0
    %984 = vmatpush1.msra.mxu0 0.0
    %985 = vmatprep.subr.mxu0 0.0
    %986 = vmatpush1.msra.mxu0 0.0
    %987 = vmatprep.subr.mxu0 0.0
    %988 = vmatpush1.msra.mxu0 0.0
    %989 = vmatprep.subr.mxu0 0.0
    %990 = vmatpush1.msra.mxu0 0.0
    %991 = vmatprep.subr.mxu0 0.0
    %992 = vmatpush1.msra.mxu0 0.0
    %993 = vmatprep.subr.mxu0 0.0
    %994 = vmatpush1.msra.mxu0 0.0
    %995 = vmatprep.subr.mxu0 0.0
    %996 = vmatpush1.msra.mxu0 0.0
    %997 = vmatprep.subr.mxu0 0.0
    %998 = vmatpush1.msra.mxu0 0.0
    %999 = vmatprep.subr.mxu0 0.0
    %1000 = vmatpush1.msra.mxu0 0.0
    %1001 = vmatprep.subr.mxu0 0.0
    %1002 = vmatpush1.msra.mxu0 0.0
    %1003 = vmatprep.subr.mxu0 0.0
    %1004 = vmatpush1.msra.mxu0 0.0
    %1005 = vmatprep.subr.mxu0 0.0
    %1006 = vmatpush1.msra.mxu0 0.0
    %1007 = vmatprep.subr.mxu0 0.0
    %1008 = vmatpush1.msra.mxu0 0.0
    %1009 = vmatprep.subr.mxu0 0.0
    %1010 = vmatpush1.msra.mxu0 0.0
    %1011 = vmatprep.subr.mxu0 0.0
    %1012 = vmatpush1.msra.mxu0 0.0
    %1013 = vmatprep.subr.mxu0 0.0
    %1014 = vmatpush1.msra.mxu0 0.0
    %1015 = vmatprep.subr.mxu0 0.0
    %1016 = vmatpush1.msra.mxu0 0.0
    %1017 = vmatprep.subr.mxu0 0.0
    %1018 = vmatpush1.msra.mxu0 0.0
    %1019 = vmatprep.subr.mxu0 0.0
    %1020 = vmatpush1.msra.mxu0 0.0
    %1021 = vmatprep.subr.mxu0 0.0
    %1022 = vmatpush1.msra.mxu0 0.0
    %1023 = vmatprep.subr.mxu0 0.0
    %1024 = vmatpush1.msra.mxu0 0.0
    %1025 = vmatprep.subr.mxu0 0.0
    %1026 = vmatpush1.msra.mxu0 0.0
    %1027 = vmatprep.mubr.f32.mxu0 0.0
    %1028 = vmatmul.mubr.f32.gmra.mrb[0].mxu0 %v714
    %v1029 = vpop.f32.mrb[0].mxu0
    %v1030 = vadd.f32 %v675, %v1029
    %v1031 = vpop.f32.mrb[0].mxu0
    %1032 = vmatprep.mubr.f32.mxu0 0.0
    %1033 = vmatmul.mubr.f32.gmra.mrb[0].mxu0 %v717
    %v1034 = vpop.f32.mrb[0].mxu0
    %v1035 = vadd.f32 %v680, %v1034
    %v1036 = vpop.f32.mrb[0].mxu0
    %1037 = vmatprep.mubr.f32.mxu0 0.0
    %1038 = vmatmul.mubr.f32.gmra.mrb[0].mxu0 %v720
    %v1039 = vpop.f32.mrb[0].mxu0
    %v1040 = vadd.f32 %v685, %v1039
    %v1041 = vpop.f32.mrb[0].mxu0
    %1042 = vmatprep.mubr.f32.mxu0 0.0
    %1043 = vmatmul.mubr.f32.gmra.mrb[0].mxu0 %v723
    %v1044 = vpop.f32.mrb[0].mxu0
    %v1045 = vadd.f32 %v690, %v1044
    %v1046 = vpop.f32.mrb[0].mxu0
    %1047 = vmatprep.mubr.f32.mxu0 0.0
    %1048 = vmatmul.mubr.f32.gmra.mrb[0].mxu0 %v726
    %v1049 = vpop.f32.mrb[0].mxu0
    %v1050 = vadd.f32 %v695, %v1049
    %v1051 = vpop.f32.mrb[0].mxu0
    %1052 = vmatprep.mubr.f32.mxu0 0.0
    %1053 = vmatmul.mubr.f32.gmra.mrb[0].mxu0 %v729
    %v1054 = vpop.f32.mrb[0].mxu0
    %v1055 = vadd.f32 %v700, %v1054
    %v1056 = vpop.f32.mrb[0].mxu0
    %1057 = vmatprep.mubr.f32.mxu0 0.0
    %1058 = vmatmul.mubr.f32.gmra.mrb[0].mxu0 %v732
    %v1059 = vpop.f32.mrb[0].mxu0
    %v1060 = vadd.f32 %v705, %v1059
    %v1061 = vpop.f32.mrb[0].mxu0
    %1062 = vmatprep.mubr.f32.mxu0 0.0
    %1063 = vmatmul.mubr.f32.gmra.mrb[0].mxu0 %v735
    %v1064 = vpop.f32.mrb[0].mxu0
    %v1065 = vadd.f32 %v710, %v1064
    %v1066 = vpop.f32.mrb[0].mxu0
    %1067 = vdwg.mxu0
    %v1068 = vtanh.pop %v804
    %v1069 = vtanh.pop %v806
    %v1070 = vtanh.pop %v917
    %v1071 = vtanh.pop %v919
    %v1072 = vtanh.pop %v1030
    %v1073 = vtanh.pop %v810
    %v1074 = vtanh.pop %v812
    %v1075 = vtanh.pop %v923
    %v1076 = vtanh.pop %v925
    %v1077 = vtanh.pop %v1035
    %v1078 = vtanh.pop %v816
    %v1079 = vtanh.pop %v818
    %v1080 = vtanh.pop %v929
    %v1081 = vtanh.pop %v931
    %v1082 = vtanh.pop %v1040
    %v1083 = vtanh.pop %v822
    %v1084 = vtanh.pop %v824
    %v1085 = vtanh.pop %v935
    %v1086 = vtanh.pop %v937
    %v1087 = vtanh.pop %v1045
    %v1088 = vtanh.pop %v828
    %v1089 = vtanh.pop %v830
    %v1090 = vtanh.pop %v941
    %v1091 = vtanh.pop %v943
    %v1092 = vtanh.pop %v1050
    %v1093 = vtanh.pop %v834
    %v1094 = vtanh.pop %v836
    %v1095 = vtanh.pop %v947
    %v1096 = vtanh.pop %v949
    %v1097 = vtanh.pop %v1055
    %v1098 = vtanh.pop %v840
    %v1099 = vtanh.pop %v842
    %v1100 = vtanh.pop %v953
    %v1101 = vtanh.pop %v955
    %v1102 = vtanh.pop %v1060
    %v1103 = vtanh.pop %v846
    %v1104 = vtanh.pop %v848
    %v1105 = vtanh.pop %v959
    %v1106 = vtanh.pop %v961
    %v1107 = vtanh.pop %v1065
    %v1108 = vld [vmem:[%s7] sm:$0xff]
    %v1109 = vld [vmem:[%s7 + $0x8] sm:$0xff]
    %v1110 = vld [vmem:[%s7 + $0x10] sm:$0xff]
    %v1111 = vld [vmem:[%s7 + $0x18] sm:$0xff]
    %v1112 = vld [vmem:[%s8] sm:$0xff]
    %v1113 = vld [vmem:[%s8 + $0x8] sm:$0xff]
    %v1114 = vld [vmem:[%s8 + $0x10] sm:$0xff]
    %v1115 = vld [vmem:[%s8 + $0x18] sm:$0xff]
    %1117 = vset.pattern.permute.xlu0 0
    %1118 = vperm.xlu0 %1117, %v1112
    %v1119 = vpop.permute.xlu0 %1118
    %1122 = vset.pattern.permute.xlu0 0
    %1123 = vperm.xlu0 %1122, %v1113
    %v1124 = vpop.permute.xlu0 %1123
    %1127 = vset.pattern.permute.xlu0 0
    %1128 = vperm.xlu0 %1127, %v1114
    %v1129 = vpop.permute.xlu0 %1128
    %1132 = vset.pattern.permute.xlu0 0
    %1133 = vperm.xlu0 %1132, %v1115
    %v1134 = vpop.permute.xlu0 %1133
    %vm1136 = vcmask 523264
    %v1138 = vsel %vm1136, %v1108, 0
    %v1141 = vsel %vm1136, %v1109, 0
    %v1144 = vsel %vm1136, %v1110, 0
    %v1147 = vsel %vm1136, %v1111, 0
    %1149 = vmatprep.subr.mxu0 %v1069
    %1150 = vmatpush1.msra.mxu0 %v1068
    %1151 = vmatprep.subr.mxu0 %v1074
    %1152 = vmatpush1.msra.mxu0 %v1073
    %1153 = vmatprep.subr.mxu0 %v1079
    %1154 = vmatpush1.msra.mxu0 %v1078
    %1155 = vmatprep.subr.mxu0 %v1084
    %1156 = vmatpush1.msra.mxu0 %v1083
    %1157 = vmatprep.subr.mxu0 %v1089
    %1158 = vmatpush1.msra.mxu0 %v1088
    %1159 = vmatprep.subr.mxu0 %v1094
    %1160 = vmatpush1.msra.mxu0 %v1093
    %1161 = vmatprep.subr.mxu0 %v1099
    %1162 = vmatpush1.msra.mxu0 %v1098
    %1163 = vmatprep.subr.mxu0 %v1104
    %1164 = vmatpush1.msra.mxu0 %v1103
    %1165 = vmatprep.subr.mxu0 0.0
    %1166 = vmatpush1.msra.mxu0 0.0
    %1167 = vmatprep.subr.mxu0 0.0
    %1168 = vmatpush1.msra.mxu0 0.0
    %1169 = vmatprep.subr.mxu0 0.0
    %1170 = vmatpush1.msra.mxu0 0.0
    %1171 = vmatprep.subr.mxu0 0.0
    %1172 = vmatpush1.msra.mxu0 0.0
    %1173 = vmatprep.subr.mxu0 0.0
    %1174 = vmatpush1.msra.mxu0 0.0
    %1175 = vmatprep.subr.mxu0 0.0
    %1176 = vmatpush1.msra.mxu0 0.0
    %1177 = vmatprep.subr.mxu0 0.0
    %1178 = vmatpush1.msra.mxu0 0.0
    %1179 = vmatprep.subr.mxu0 0.0
    %1180 = vmatpush1.msra.mxu0 0.0
    %1181 = vmatprep.subr.mxu0 0.0
    %1182 = vmatpush1.msra.mxu0 0.0
    %1183 = vmatprep.subr.mxu0 0.0
    %1184 = vmatpush1.msra.mxu0 0.0
    %1185 = vmatprep.subr.mxu0 0.0
    %1186 = vmatpush1.msra.mxu0 0.0
    %1187 = vmatprep.subr.mxu0 0.0
    %1188 = vmatpush1.msra.mxu0 0.0
    %1189 = vmatprep.subr.mxu0 0.0
    %1190 = vmatpush1.msra.mxu0 0.0
    %1191 = vmatprep.subr.mxu0 0.0
    %1192 = vmatpush1.msra.mxu0 0.0
    %1193 = vmatprep.subr.mxu0 0.0
    %1194 = vmatpush1.msra.mxu0 0.0
    %1195 = vmatprep.subr.mxu0 0.0
    %1196 = vmatpush1.msra.mxu0 0.0
    %1197 = vmatprep.subr.mxu0 0.0
    %1198 = vmatpush1.msra.mxu0 0.0
    %1199 = vmatprep.subr.mxu0 0.0
    %1200 = vmatpush1.msra.mxu0 0.0
    %1201 = vmatprep.subr.mxu0 0.0
    %1202 = vmatpush1.msra.mxu0 0.0
    %1203 = vmatprep.subr.mxu0 0.0
    %1204 = vmatpush1.msra.mxu0 0.0
    %1205 = vmatprep.subr.mxu0 0.0
    %1206 = vmatpush1.msra.mxu0 0.0
    %1207 = vmatprep.subr.mxu0 0.0
    %1208 = vmatpush1.msra.mxu0 0.0
    %1209 = vmatprep.subr.mxu0 0.0
    %1210 = vmatpush1.msra.mxu0 0.0
    %1211 = vmatprep.subr.mxu0 0.0
    %1212 = vmatpush1.msra.mxu0 0.0
    %1213 = vmatprep.mubr.f32.mxu0 0.0
    %1214 = vmatmul.mubr.f32.gmra.mrb[0].mxu0 %v1138
    %v1215 = vpop.f32.mrb[0].mxu0
    %v1216 = vadd.f32 %v1119, %v1215
    %v1217 = vpop.f32.mrb[0].mxu0
    %v1218 = vadd.f32 %v1119, %v1217
    %1219 = vmatprep.mubr.f32.mxu0 0.0
    %1220 = vmatmul.mubr.f32.gmra.mrb[0].mxu0 %v1141
    %v1221 = vpop.f32.mrb[0].mxu0
    %v1222 = vadd.f32 %v1124, %v1221
    %v1223 = vpop.f32.mrb[0].mxu0
    %v1224 = vadd.f32 %v1124, %v1223
    %1225 = vmatprep.mubr.f32.mxu0 0.0
    %1226 = vmatmul.mubr.f32.gmra.mrb[0].mxu0 %v1144
    %v1227 = vpop.f32.mrb[0].mxu0
    %v1228 = vadd.f32 %v1129, %v1227
    %v1229 = vpop.f32.mrb[0].mxu0
    %v1230 = vadd.f32 %v1129, %v1229
    %1231 = vmatprep.mubr.f32.mxu0 0.0
    %1232 = vmatmul.mubr.f32.gmra.mrb[0].mxu0 %v1147
    %v1233 = vpop.f32.mrb[0].mxu0
    %v1234 = vadd.f32 %v1134, %v1233
    %v1235 = vpop.f32.mrb[0].mxu0
    %v1236 = vadd.f32 %v1134, %v1235
    %1237 = vdwg.mxu0
    %1238 = vmatprep.subr.mxu0 %v1071
    %1239 = vmatpush1.msra.mxu0 %v1070
    %1240 = vmatprep.subr.mxu0 %v1076
    %1241 = vmatpush1.msra.mxu0 %v1075
    %1242 = vmatprep.subr.mxu0 %v1081
    %1243 = vmatpush1.msra.mxu0 %v1080
    %1244 = vmatprep.subr.mxu0 %v1086
    %1245 = vmatpush1.msra.mxu0 %v1085
    %1246 = vmatprep.subr.mxu0 %v1091
    %1247 = vmatpush1.msra.mxu0 %v1090
    %1248 = vmatprep.subr.mxu0 %v1096
    %1249 = vmatpush1.msra.mxu0 %v1095
    %1250 = vmatprep.subr.mxu0 %v1101
    %1251 = vmatpush1.msra.mxu0 %v1100
    %1252 = vmatprep.subr.mxu0 %v1106
    %1253 = vmatpush1.msra.mxu0 %v1105
    %1254 = vmatprep.subr.mxu0 0.0
    %1255 = vmatpush1.msra.mxu0 0.0
    %1256 = vmatprep.subr.mxu0 0.0
    %1257 = vmatpush1.msra.mxu0 0.0
    %1258 = vmatprep.subr.mxu0 0.0
    %1259 = vmatpush1.msra.mxu0 0.0
    %1260 = vmatprep.subr.mxu0 0.0
    %1261 = vmatpush1.msra.mxu0 0.0
    %1262 = vmatprep.subr.mxu0 0.0
    %1263 = vmatpush1.msra.mxu0 0.0
    %1264 = vmatprep.subr.mxu0 0.0
    %1265 = vmatpush1.msra.mxu0 0.0
    %1266 = vmatprep.subr.mxu0 0.0
    %1267 = vmatpush1.msra.mxu0 0.0
    %1268 = vmatprep.subr.mxu0 0.0
    %1269 = vmatpush1.msra.mxu0 0.0
    %1270 = vmatprep.subr.mxu0 0.0
    %1271 = vmatpush1.msra.mxu0 0.0
    %1272 = vmatprep.subr.mxu0 0.0
    %1273 = vmatpush1.msra.mxu0 0.0
    %1274 = vmatprep.subr.mxu0 0.0
    %1275 = vmatpush1.msra.mxu0 0.0
    %1276 = vmatprep.subr.mxu0 0.0
    %1277 = vmatpush1.msra.mxu0 0.0
    %1278 = vmatprep.subr.mxu0 0.0
    %1279 = vmatpush1.msra.mxu0 0.0
    %1280 = vmatprep.subr.mxu0 0.0
    %1281 = vmatpush1.msra.mxu0 0.0
    %1282 = vmatprep.subr.mxu0 0.0
    %1283 = vmatpush1.msra.mxu0 0.0
    %1284 = vmatprep.subr.mxu0 0.0
    %1285 = vmatpush1.msra.mxu0 0.0
    %1286 = vmatprep.subr.mxu0 0.0
    %1287 = vmatpush1.msra.mxu0 0.0
    %1288 = vmatprep.subr.mxu0 0.0
    %1289 = vmatpush1.msra.mxu0 0.0
    %1290 = vmatprep.subr.mxu0 0.0
    %1291 = vmatpush1.msra.mxu0 0.0
    %1292 = vmatprep.subr.mxu0 0.0
    %1293 = vmatpush1.msra.mxu0 0.0
    %1294 = vmatprep.subr.mxu0 0.0
    %1295 = vmatpush1.msra.mxu0 0.0
    %1296 = vmatprep.subr.mxu0 0.0
    %1297 = vmatpush1.msra.mxu0 0.0
    %1298 = vmatprep.subr.mxu0 0.0
    %1299 = vmatpush1.msra.mxu0 0.0
    %1300 = vmatprep.subr.mxu0 0.0
    %1301 = vmatpush1.msra.mxu0 0.0
    %1302 = vmatprep.mubr.f32.mxu0 0.0
    %1303 = vmatmul.mubr.f32.gmra.mrb[0].mxu0 %v1138
    %v1304 = vpop.f32.mrb[0].mxu0
    %v1305 = vadd.f32 %v1119, %v1304
    %v1306 = vpop.f32.mrb[0].mxu0
    %v1307 = vadd.f32 %v1119, %v1306
    %1308 = vmatprep.mubr.f32.mxu0 0.0
    %1309 = vmatmul.mubr.f32.gmra.mrb[0].mxu0 %v1141
    %v1310 = vpop.f32.mrb[0].mxu0
    %v1311 = vadd.f32 %v1124, %v1310
    %v1312 = vpop.f32.mrb[0].mxu0
    %v1313 = vadd.f32 %v1124, %v1312
    %1314 = vmatprep.mubr.f32.mxu0 0.0
    %1315 = vmatmul.mubr.f32.gmra.mrb[0].mxu0 %v1144
    %v1316 = vpop.f32.mrb[0].mxu0
    %v1317 = vadd.f32 %v1129, %v1316
    %v1318 = vpop.f32.mrb[0].mxu0
    %v1319 = vadd.f32 %v1129, %v1318
    %1320 = vmatprep.mubr.f32.mxu0 0.0
    %1321 = vmatmul.mubr.f32.gmra.mrb[0].mxu0 %v1147
    %v1322 = vpop.f32.mrb[0].mxu0
    %v1323 = vadd.f32 %v1134, %v1322
    %v1324 = vpop.f32.mrb[0].mxu0
    %v1325 = vadd.f32 %v1134, %v1324
    %1326 = vdwg.mxu0
    %1327 = vmatprep.subr.mxu0 0.0
    %1328 = vmatpush1.msra.mxu0 %v1072
    %1329 = vmatprep.subr.mxu0 0.0
    %1330 = vmatpush1.msra.mxu0 %v1077
    %1331 = vmatprep.subr.mxu0 0.0
    %1332 = vmatpush1.msra.mxu0 %v1082
    %1333 = vmatprep.subr.mxu0 0.0
    %1334 = vmatpush1.msra.mxu0 %v1087
    %1335 = vmatprep.subr.mxu0 0.0
    %1336 = vmatpush1.msra.mxu0 %v1092
    %1337 = vmatprep.subr.mxu0 0.0
    %1338 = vmatpush1.msra.mxu0 %v1097
    %1339 = vmatprep.subr.mxu0 0.0
    %1340 = vmatpush1.msra.mxu0 %v1102
    %1341 = vmatprep.subr.mxu0 0.0
    %1342 = vmatpush1.msra.mxu0 %v1107
    %1343 = vmatprep.subr.mxu0 0.0
    %1344 = vmatpush1.msra.mxu0 0.0
    %1345 = vmatprep.subr.mxu0 0.0
    %1346 = vmatpush1.msra.mxu0 0.0
    %1347 = vmatprep.subr.mxu0 0.0
    %1348 = vmatpush1.msra.mxu0 0.0
    %1349 = vmatprep.subr.mxu0 0.0
    %1350 = vmatpush1.msra.mxu0 0.0
    %1351 = vmatprep.subr.mxu0 0.0
    %1352 = vmatpush1.msra.mxu0 0.0
    %1353 = vmatprep.subr.mxu0 0.0
    %1354 = vmatpush1.msra.mxu0 0.0
    %1355 = vmatprep.subr.mxu0 0.0
    %1356 = vmatpush1.msra.mxu0 0.0
    %1357 = vmatprep.subr.mxu0 0.0
    %1358 = vmatpush1.msra.mxu0 0.0
    %1359 = vmatprep.subr.mxu0 0.0
    %1360 = vmatpush1.msra.mxu0 0.0
    %1361 = vmatprep.subr.mxu0 0.0
    %1362 = vmatpush1.msra.mxu0 0.0
    %1363 = vmatprep.subr.mxu0 0.0
    %1364 = vmatpush1.msra.mxu0 0.0
    %1365 = vmatprep.subr.mxu0 0.0
    %1366 = vmatpush1.msra.mxu0 0.0
    %1367 = vmatprep.subr.mxu0 0.0
    %1368 = vmatpush1.msra.mxu0 0.0
    %1369 = vmatprep.subr.mxu0 0.0
    %1370 = vmatpush1.msra.mxu0 0.0
    %1371 = vmatprep.subr.mxu0 0.0
    %1372 = vmatpush1.msra.mxu0 0.0
    %1373 = vmatprep.subr.mxu0 0.0
    %1374 = vmatpush1.msra.mxu0 0.0
    %1375 = vmatprep.subr.mxu0 0.0
    %1376 = vmatpush1.msra.mxu0 0.0
    %1377 = vmatprep.subr.mxu0 0.0
    %1378 = vmatpush1.msra.mxu0 0.0
    %1379 = vmatprep.subr.mxu0 0.0
    %1380 = vmatpush1.msra.mxu0 0.0
    %1381 = vmatprep.subr.mxu0 0.0
    %1382 = vmatpush1.msra.mxu0 0.0
    %1383 = vmatprep.subr.mxu0 0.0
    %1384 = vmatpush1.msra.mxu0 0.0
    %1385 = vmatprep.subr.mxu0 0.0
    %1386 = vmatpush1.msra.mxu0 0.0
    %1387 = vmatprep.subr.mxu0 0.0
    %1388 = vmatpush1.msra.mxu0 0.0
    %1389 = vmatprep.subr.mxu0 0.0
    %1390 = vmatpush1.msra.mxu0 0.0
    %1391 = vmatprep.mubr.f32.mxu0 0.0
    %1392 = vmatmul.mubr.f32.gmra.mrb[0].mxu0 %v1138
    %v1393 = vpop.f32.mrb[0].mxu0
    %v1394 = vadd.f32 %v1119, %v1393
    %v1395 = vpop.f32.mrb[0].mxu0
    %1396 = vmatprep.mubr.f32.mxu0 0.0
    %1397 = vmatmul.mubr.f32.gmra.mrb[0].mxu0 %v1141
    %v1398 = vpop.f32.mrb[0].mxu0
    %v1399 = vadd.f32 %v1124, %v1398
    %v1400 = vpop.f32.mrb[0].mxu0
    %1401 = vmatprep.mubr.f32.mxu0 0.0
    %1402 = vmatmul.mubr.f32.gmra.mrb[0].mxu0 %v1144
    %v1403 = vpop.f32.mrb[0].mxu0
    %v1404 = vadd.f32 %v1129, %v1403
    %v1405 = vpop.f32.mrb[0].mxu0
    %1406 = vmatprep.mubr.f32.mxu0 0.0
    %1407 = vmatmul.mubr.f32.gmra.mrb[0].mxu0 %v1147
    %v1408 = vpop.f32.mrb[0].mxu0
    %v1409 = vadd.f32 %v1134, %v1408
    %v1410 = vpop.f32.mrb[0].mxu0
    %1411 = vdwg.mxu0
    %v1412 = vtanh.pop %v1216
    %v1413 = vtanh.pop %v1218
    %v1414 = vtanh.pop %v1305
    %v1415 = vtanh.pop %v1307
    %v1416 = vtanh.pop %v1394
    %v1417 = vtanh.pop %v1222
    %v1418 = vtanh.pop %v1224
    %v1419 = vtanh.pop %v1311
    %v1420 = vtanh.pop %v1313
    %v1421 = vtanh.pop %v1399
    %v1422 = vtanh.pop %v1228
    %v1423 = vtanh.pop %v1230
    %v1424 = vtanh.pop %v1317
    %v1425 = vtanh.pop %v1319
    %v1426 = vtanh.pop %v1404
    %v1427 = vtanh.pop %v1234
    %v1428 = vtanh.pop %v1236
    %v1429 = vtanh.pop %v1323
    %v1430 = vtanh.pop %v1325
    %v1431 = vtanh.pop %v1409
    %v1432 = vld [vmem:[%s9] sm:$0xff]
    %v1433 = vld [vmem:[%s9 + $0x8] sm:$0xff]
    %v1434 = vld [vmem:[%s10] sm:$0xff]
    %v1435 = vld [vmem:[%s10 + $0x8] sm:$0xff]
    %1437 = vset.pattern.permute.xlu0 0
    %1438 = vperm.xlu0 %1437, %v1434
    %v1439 = vpop.permute.xlu0 %1438
    %1442 = vset.pattern.permute.xlu0 0
    %1443 = vperm.xlu0 %1442, %v1435
    %v1444 = vpop.permute.xlu0 %1443
    %v1447 = vsel %vm712, %v1432, 0
    %v1450 = vsel %vm712, %v1433, 0
    %1452 = vmatprep.subr.mxu0 %v1413
    %1453 = vmatpush1.msra.mxu0 %v1412
    %1454 = vmatprep.subr.mxu0 %v1418
    %1455 = vmatpush1.msra.mxu0 %v1417
    %1456 = vmatprep.subr.mxu0 %v1423
    %1457 = vmatpush1.msra.mxu0 %v1422
    %1458 = vmatprep.subr.mxu0 %v1428
    %1459 = vmatpush1.msra.mxu0 %v1427
    %1460 = vmatprep.subr.mxu0 0.0
    %1461 = vmatpush1.msra.mxu0 0.0
    %1462 = vmatprep.subr.mxu0 0.0
    %1463 = vmatpush1.msra.mxu0 0.0
    %1464 = vmatprep.subr.mxu0 0.0
    %1465 = vmatpush1.msra.mxu0 0.0
    %1466 = vmatprep.subr.mxu0 0.0
    %1467 = vmatpush1.msra.mxu0 0.0
    %1468 = vmatprep.subr.mxu0 0.0
    %1469 = vmatpush1.msra.mxu0 0.0
    %1470 = vmatprep.subr.mxu0 0.0
    %1471 = vmatpush1.msra.mxu0 0.0
    %1472 = vmatprep.subr.mxu0 0.0
    %1473 = vmatpush1.msra.mxu0 0.0
    %1474 = vmatprep.subr.mxu0 0.0
    %1475 = vmatpush1.msra.mxu0 0.0
    %1476 = vmatprep.subr.mxu0 0.0
    %1477 = vmatpush1.msra.mxu0 0.0
    %1478 = vmatprep.subr.mxu0 0.0
    %1479 = vmatpush1.msra.mxu0 0.0
    %1480 = vmatprep.subr.mxu0 0.0
    %1481 = vmatpush1.msra.mxu0 0.0
    %1482 = vmatprep.subr.mxu0 0.0
    %1483 = vmatpush1.msra.mxu0 0.0
    %1484 = vmatprep.subr.mxu0 0.0
    %1485 = vmatpush1.msra.mxu0 0.0
    %1486 = vmatprep.subr.mxu0 0.0
    %1487 = vmatpush1.msra.mxu0 0.0
    %1488 = vmatprep.subr.mxu0 0.0
    %1489 = vmatpush1.msra.mxu0 0.0
    %1490 = vmatprep.subr.mxu0 0.0
    %1491 = vmatpush1.msra.mxu0 0.0
    %1492 = vmatprep.subr.mxu0 0.0
    %1493 = vmatpush1.msra.mxu0 0.0
    %1494 = vmatprep.subr.mxu0 0.0
    %1495 = vmatpush1.msra.mxu0 0.0
    %1496 = vmatprep.subr.mxu0 0.0
    %1497 = vmatpush1.msra.mxu0 0.0
    %1498 = vmatprep.subr.mxu0 0.0
    %1499 = vmatpush1.msra.mxu0 0.0
    %1500 = vmatprep.subr.mxu0 0.0
    %1501 = vmatpush1.msra.mxu0 0.0
    %1502 = vmatprep.subr.mxu0 0.0
    %1503 = vmatpush1.msra.mxu0 0.0
    %1504 = vmatprep.subr.mxu0 0.0
    %1505 = vmatpush1.msra.mxu0 0.0
    %1506 = vmatprep.subr.mxu0 0.0
    %1507 = vmatpush1.msra.mxu0 0.0
    %1508 = vmatprep.subr.mxu0 0.0
    %1509 = vmatpush1.msra.mxu0 0.0
    %1510 = vmatprep.subr.mxu0 0.0
    %1511 = vmatpush1.msra.mxu0 0.0
    %1512 = vmatprep.subr.mxu0 0.0
    %1513 = vmatpush1.msra.mxu0 0.0
    %1514 = vmatprep.subr.mxu0 0.0
    %1515 = vmatpush1.msra.mxu0 0.0
    %1516 = vmatprep.mubr.f32.mxu0 0.0
    %1517 = vmatmul.mubr.f32.gmra.mrb[0].mxu0 %v1447
    %v1518 = vpop.f32.mrb[0].mxu0
    %v1519 = vadd.f32 %v1439, %v1518
    %v1520 = vpop.f32.mrb[0].mxu0
    %v1521 = vadd.f32 %v1439, %v1520
    %1522 = vmatprep.mubr.f32.mxu0 0.0
    %1523 = vmatmul.mubr.f32.gmra.mrb[0].mxu0 %v1450
    %v1524 = vpop.f32.mrb[0].mxu0
    %v1525 = vadd.f32 %v1444, %v1524
    %v1526 = vpop.f32.mrb[0].mxu0
    %v1527 = vadd.f32 %v1444, %v1526
    %1528 = vdwg.mxu0
    %1529 = vmatprep.subr.mxu0 %v1415
    %1530 = vmatpush1.msra.mxu0 %v1414
    %1531 = vmatprep.subr.mxu0 %v1420
    %1532 = vmatpush1.msra.mxu0 %v1419
    %1533 = vmatprep.subr.mxu0 %v1425
    %1534 = vmatpush1.msra.mxu0 %v1424
    %1535 = vmatprep.subr.mxu0 %v1430
    %1536 = vmatpush1.msra.mxu0 %v1429
    %1537 = vmatprep.subr.mxu0 0.0
    %1538 = vmatpush1.msra.mxu0 0.0
    %1539 = vmatprep.subr.mxu0 0.0
    %1540 = vmatpush1.msra.mxu0 0.0
    %1541 = vmatprep.subr.mxu0 0.0
    %1542 = vmatpush1.msra.mxu0 0.0
    %1543 = vmatprep.subr.mxu0 0.0
    %1544 = vmatpush1.msra.mxu0 0.0
    %1545 = vmatprep.subr.mxu0 0.0
    %1546 = vmatpush1.msra.mxu0 0.0
    %1547 = vmatprep.subr.mxu0 0.0
    %1548 = vmatpush1.msra.mxu0 0.0
    %1549 = vmatprep.subr.mxu0 0.0
    %1550 = vmatpush1.msra.mxu0 0.0
    %1551 = vmatprep.subr.mxu0 0.0
    %1552 = vmatpush1.msra.mxu0 0.0
    %1553 = vmatprep.subr.mxu0 0.0
    %1554 = vmatpush1.msra.mxu0 0.0
    %1555 = vmatprep.subr.mxu0 0.0
    %1556 = vmatpush1.msra.mxu0 0.0
    %1557 = vmatprep.subr.mxu0 0.0
    %1558 = vmatpush1.msra.mxu0 0.0
    %1559 = vmatprep.subr.mxu0 0.0
    %1560 = vmatpush1.msra.mxu0 0.0
    %1561 = vmatprep.subr.mxu0 0.0
    %1562 = vmatpush1.msra.mxu0 0.0
    %1563 = vmatprep.subr.mxu0 0.0
    %1564 = vmatpush1.msra.mxu0 0.0
    %1565 = vmatprep.subr.mxu0 0.0
    %1566 = vmatpush1.msra.mxu0 0.0
    %1567 = vmatprep.subr.mxu0 0.0
    %1568 = vmatpush1.msra.mxu0 0.0
    %1569 = vmatprep.subr.mxu0 0.0
    %1570 = vmatpush1.msra.mxu0 0.0
    %1571 = vmatprep.subr.mxu0 0.0
    %1572 = vmatpush1.msra.mxu0 0.0
    %1573 = vmatprep.subr.mxu0 0.0
    %1574 = vmatpush1.msra.mxu0 0.0
    %1575 = vmatprep.subr.mxu0 0.0
    %1576 = vmatpush1.msra.mxu0 0.0
    %1577 = vmatprep.subr.mxu0 0.0
    %1578 = vmatpush1.msra.mxu0 0.0
    %1579 = vmatprep.subr.mxu0 0.0
    %1580 = vmatpush1.msra.mxu0 0.0
    %1581 = vmatprep.subr.mxu0 0.0
    %1582 = vmatpush1.msra.mxu0 0.0
    %1583 = vmatprep.subr.mxu0 0.0
    %1584 = vmatpush1.msra.mxu0 0.0
    %1585 = vmatprep.subr.mxu0 0.0
    %1586 = vmatpush1.msra.mxu0 0.0
    %1587 = vmatprep.subr.mxu0 0.0
    %1588 = vmatpush1.msra.mxu0 0.0
    %1589 = vmatprep.subr.mxu0 0.0
    %1590 = vmatpush1.msra.mxu0 0.0
    %1591 = vmatprep.subr.mxu0 0.0
    %1592 = vmatpush1.msra.mxu0 0.0
    %1593 = vmatprep.mubr.f32.mxu0 0.0
    %1594 = vmatmul.mubr.f32.gmra.mrb[0].mxu0 %v1447
    %v1595 = vpop.f32.mrb[0].mxu0
    %v1596 = vadd.f32 %v1439, %v1595
    %v1597 = vpop.f32.mrb[0].mxu0
    %v1598 = vadd.f32 %v1439, %v1597
    %1599 = vmatprep.mubr.f32.mxu0 0.0
    %1600 = vmatmul.mubr.f32.gmra.mrb[0].mxu0 %v1450
    %v1601 = vpop.f32.mrb[0].mxu0
    %v1602 = vadd.f32 %v1444, %v1601
    %v1603 = vpop.f32.mrb[0].mxu0
    %v1604 = vadd.f32 %v1444, %v1603
    %1605 = vdwg.mxu0
    %1606 = vmatprep.subr.mxu0 0.0
    %1607 = vmatpush1.msra.mxu0 %v1416
    %1608 = vmatprep.subr.mxu0 0.0
    %1609 = vmatpush1.msra.mxu0 %v1421
    %1610 = vmatprep.subr.mxu0 0.0
    %1611 = vmatpush1.msra.mxu0 %v1426
    %1612 = vmatprep.subr.mxu0 0.0
    %1613 = vmatpush1.msra.mxu0 %v1431
    %1614 = vmatprep.subr.mxu0 0.0
    %1615 = vmatpush1.msra.mxu0 0.0
    %1616 = vmatprep.subr.mxu0 0.0
    %1617 = vmatpush1.msra.mxu0 0.0
    %1618 = vmatprep.subr.mxu0 0.0
    %1619 = vmatpush1.msra.mxu0 0.0
    %1620 = vmatprep.subr.mxu0 0.0
    %1621 = vmatpush1.msra.mxu0 0.0
    %1622 = vmatprep.subr.mxu0 0.0
    %1623 = vmatpush1.msra.mxu0 0.0
    %1624 = vmatprep.subr.mxu0 0.0
    %1625 = vmatpush1.msra.mxu0 0.0
    %1626 = vmatprep.subr.mxu0 0.0
    %1627 = vmatpush1.msra.mxu0 0.0
    %1628 = vmatprep.subr.mxu0 0.0
    %1629 = vmatpush1.msra.mxu0 0.0
    %1630 = vmatprep.subr.mxu0 0.0
    %1631 = vmatpush1.msra.mxu0 0.0
    %1632 = vmatprep.subr.mxu0 0.0
    %1633 = vmatpush1.msra.mxu0 0.0
    %1634 = vmatprep.subr.mxu0 0.0
    %1635 = vmatpush1.msra.mxu0 0.0
    %1636 = vmatprep.subr.mxu0 0.0
    %1637 = vmatpush1.msra.mxu0 0.0
    %1638 = vmatprep.subr.mxu0 0.0
    %1639 = vmatpush1.msra.mxu0 0.0
    %1640 = vmatprep.subr.mxu0 0.0
    %1641 = vmatpush1.msra.mxu0 0.0
    %1642 = vmatprep.subr.mxu0 0.0
    %1643 = vmatpush1.msra.mxu0 0.0
    %1644 = vmatprep.subr.mxu0 0.0
    %1645 = vmatpush1.msra.mxu0 0.0
    %1646 = vmatprep.subr.mxu0 0.0
    %1647 = vmatpush1.msra.mxu0 0.0
    %1648 = vmatprep.subr.mxu0 0.0
    %1649 = vmatpush1.msra.mxu0 0.0
    %1650 = vmatprep.subr.mxu0 0.0
    %1651 = vmatpush1.msra.mxu0 0.0
    %1652 = vmatprep.subr.mxu0 0.0
    %1653 = vmatpush1.msra.mxu0 0.0
    %1654 = vmatprep.subr.mxu0 0.0
    %1655 = vmatpush1.msra.mxu0 0.0
    %1656 = vmatprep.subr.mxu0 0.0
    %1657 = vmatpush1.msra.mxu0 0.0
    %1658 = vmatprep.subr.mxu0 0.0
    %1659 = vmatpush1.msra.mxu0 0.0
    %1660 = vmatprep.subr.mxu0 0.0
    %1661 = vmatpush1.msra.mxu0 0.0
    %1662 = vmatprep.subr.mxu0 0.0
    %1663 = vmatpush1.msra.mxu0 0.0
    %1664 = vmatprep.subr.mxu0 0.0
    %1665 = vmatpush1.msra.mxu0 0.0
    %1666 = vmatprep.subr.mxu0 0.0
    %1667 = vmatpush1.msra.mxu0 0.0
    %1668 = vmatprep.subr.mxu0 0.0
    %1669 = vmatpush1.msra.mxu0 0.0
    %1670 = vmatprep.mubr.f32.mxu0 0.0
    %1671 = vmatmul.mubr.f32.gmra.mrb[0].mxu0 %v1447
    %v1672 = vpop.f32.mrb[0].mxu0
    %v1673 = vadd.f32 %v1439, %v1672
    %v1674 = vpop.f32.mrb[0].mxu0
    %1675 = vmatprep.mubr.f32.mxu0 0.0
    %1676 = vmatmul.mubr.f32.gmra.mrb[0].mxu0 %v1450
    %v1677 = vpop.f32.mrb[0].mxu0
    %v1678 = vadd.f32 %v1444, %v1677
    %v1679 = vpop.f32.mrb[0].mxu0
    %1680 = vdwg.mxu0
    %v1681 = vtanh.pop %v1519
    %v1682 = vtanh.pop %v1521
    %v1683 = vtanh.pop %v1596
    %v1684 = vtanh.pop %v1598
    %v1685 = vtanh.pop %v1673
    %v1686 = vtanh.pop %v1525
    %v1687 = vtanh.pop %v1527
    %v1688 = vtanh.pop %v1602
    %v1689 = vtanh.pop %v1604
    %v1690 = vtanh.pop %v1678
    %v1691 = vld [vmem:[%s11] sm:$0xff]
    %v1692 = vld [vmem:[%s12] sm:$0xff]
    %1694 = vset.pattern.permute.xlu0 0
    %1695 = vperm.xlu0 %1694, %v1692
    %v1696 = vpop.permute.xlu0 %1695
    %v1699 = vsel %vm360, %v1691, 0
    %1701 = vmatprep.subr.mxu0 %v1682
    %1702 = vmatpush1.msra.mxu0 %v1681
    %1703 = vmatprep.subr.mxu0 %v1687
    %1704 = vmatpush1.msra.mxu0 %v1686
    %1705 = vmatprep.subr.mxu0 0.0
    %1706 = vmatpush1.msra.mxu0 0.0
    %1707 = vmatprep.subr.mxu0 0.0
    %1708 = vmatpush1.msra.mxu0 0.0
    %1709 = vmatprep.subr.mxu0 0.0
    %1710 = vmatpush1.msra.mxu0 0.0
    %1711 = vmatprep.subr.mxu0 0.0
    %1712 = vmatpush1.msra.mxu0 0.0
    %1713 = vmatprep.subr.mxu0 0.0
    %1714 = vmatpush1.msra.mxu0 0.0
    %1715 = vmatprep.subr.mxu0 0.0
    %1716 = vmatpush1.msra.mxu0 0.0
    %1717 = vmatprep.subr.mxu0 0.0
    %1718 = vmatpush1.msra.mxu0 0.0
    %1719 = vmatprep.subr.mxu0 0.0
    %1720 = vmatpush1.msra.mxu0 0.0
    %1721 = vmatprep.subr.mxu0 0.0
    %1722 = vmatpush1.msra.mxu0 0.0
    %1723 = vmatprep.subr.mxu0 0.0
    %1724 = vmatpush1.msra.mxu0 0.0
    %1725 = vmatprep.subr.mxu0 0.0
    %1726 = vmatpush1.msra.mxu0 0.0
    %1727 = vmatprep.subr.mxu0 0.0
    %1728 = vmatpush1.msra.mxu0 0.0
    %1729 = vmatprep.subr.mxu0 0.0
    %1730 = vmatpush1.msra.mxu0 0.0
    %1731 = vmatprep.subr.mxu0 0.0
    %1732 = vmatpush1.msra.mxu0 0.0
    %1733 = vmatprep.subr.mxu0 0.0
    %1734 = vmatpush1.msra.mxu0 0.0
    %1735 = vmatprep.subr.mxu0 0.0
    %1736 = vmatpush1.msra.mxu0 0.0
    %1737 = vmatprep.subr.mxu0 0.0
    %1738 = vmatpush1.msra.mxu0 0.0
    %1739 = vmatprep.subr.mxu0 0.0
    %1740 = vmatpush1.msra.mxu0 0.0
    %1741 = vmatprep.subr.mxu0 0.0
    %1742 = vmatpush1.msra.mxu0 0.0
    %1743 = vmatprep.subr.mxu0 0.0
    %1744 = vmatpush1.msra.mxu0 0.0
    %1745 = vmatprep.subr.mxu0 0.0
    %1746 = vmatpush1.msra.mxu0 0.0
    %1747 = vmatprep.subr.mxu0 0.0
    %1748 = vmatpush1.msra.mxu0 0.0
    %1749 = vmatprep.subr.mxu0 0.0
    %1750 = vmatpush1.msra.mxu0 0.0
    %1751 = vmatprep.subr.mxu0 0.0
    %1752 = vmatpush1.msra.mxu0 0.0
    %1753 = vmatprep.subr.mxu0 0.0
    %1754 = vmatpush1.msra.mxu0 0.0
    %1755 = vmatprep.subr.mxu0 0.0
    %1756 = vmatpush1.msra.mxu0 0.0
    %1757 = vmatprep.subr.mxu0 0.0
    %1758 = vmatpush1.msra.mxu0 0.0
    %1759 = vmatprep.subr.mxu0 0.0
    %1760 = vmatpush1.msra.mxu0 0.0
    %1761 = vmatprep.subr.mxu0 0.0
    %1762 = vmatpush1.msra.mxu0 0.0
    %1763 = vmatprep.subr.mxu0 0.0
    %1764 = vmatpush1.msra.mxu0 0.0
    %1765 = vmatprep.mubr.f32.mxu0 0.0
    %1766 = vmatmul.mubr.f32.gmra.mrb[0].mxu0 %v1699
    %v1767 = vpop.f32.mrb[0].mxu0
    %v1768 = vadd.f32 %v1696, %v1767
    %v1769 = vpop.f32.mrb[0].mxu0
    %v1770 = vadd.f32 %v1696, %v1769
    %1771 = vdwg.mxu0
    %1772 = vmatprep.subr.mxu0 %v1684
    %1773 = vmatpush1.msra.mxu0 %v1683
    %1774 = vmatprep.subr.mxu0 %v1689
    %1775 = vmatpush1.msra.mxu0 %v1688
    %1776 = vmatprep.subr.mxu0 0.0
    %1777 = vmatpush1.msra.mxu0 0.0
    %1778 = vmatprep.subr.mxu0 0.0
    %1779 = vmatpush1.msra.mxu0 0.0
    %1780 = vmatprep.subr.mxu0 0.0
    %1781 = vmatpush1.msra.mxu0 0.0
    %1782 = vmatprep.subr.mxu0 0.0
    %1783 = vmatpush1.msra.mxu0 0.0
    %1784 = vmatprep.subr.mxu0 0.0
    %1785 = vmatpush1.msra.mxu0 0.0
    %1786 = vmatprep.subr.mxu0 0.0
    %1787 = vmatpush1.msra.mxu0 0.0
    %1788 = vmatprep.subr.mxu0 0.0
    %1789 = vmatpush1.msra.mxu0 0.0
    %1790 = vmatprep.subr.mxu0 0.0
    %1791 = vmatpush1.msra.mxu0 0.0
    %1792 = vmatprep.subr.mxu0 0.0
    %1793 = vmatpush1.msra.mxu0 0.0
    %1794 = vmatprep.subr.mxu0 0.0
    %1795 = vmatpush1.msra.mxu0 0.0
    %1796 = vmatprep.subr.mxu0 0.0
    %1797 = vmatpush1.msra.mxu0 0.0
    %1798 = vmatprep.subr.mxu0 0.0
    %1799 = vmatpush1.msra.mxu0 0.0
    %1800 = vmatprep.subr.mxu0 0.0
    %1801 = vmatpush1.msra.mxu0 0.0
    %1802 = vmatprep.subr.mxu0 0.0
    %1803 = vmatpush1.msra.mxu0 0.0
    %1804 = vmatprep.subr.mxu0 0.0
    %1805 = vmatpush1.msra.mxu0 0.0
    %1806 = vmatprep.subr.mxu0 0.0
    %1807 = vmatpush1.msra.mxu0 0.0
    %1808 = vmatprep.subr.mxu0 0.0
    %1809 = vmatpush1.msra.mxu0 0.0
    %1810 = vmatprep.subr.mxu0 0.0
    %1811 = vmatpush1.msra.mxu0 0.0
    %1812 = vmatprep.subr.mxu0 0.0
    %1813 = vmatpush1.msra.mxu0 0.0
    %1814 = vmatprep.subr.mxu0 0.0
    %1815 = vmatpush1.msra.mxu0 0.0
    %1816 = vmatprep.subr.mxu0 0.0
    %1817 = vmatpush1.msra.mxu0 0.0
    %1818 = vmatprep.subr.mxu0 0.0
    %1819 = vmatpush1.msra.mxu0 0.0
    %1820 = vmatprep.subr.mxu0 0.0
    %1821 = vmatpush1.msra.mxu0 0.0
    %1822 = vmatprep.subr.mxu0 0.0
    %1823 = vmatpush1.msra.mxu0 0.0
    %1824 = vmatprep.subr.mxu0 0.0
    %1825 = vmatpush1.msra.mxu0 0.0
    %1826 = vmatprep.subr.mxu0 0.0
    %1827 = vmatpush1.msra.mxu0 0.0
    %1828 = vmatprep.subr.mxu0 0.0
    %1829 = vmatpush1.msra.mxu0 0.0
    %1830 = vmatprep.subr.mxu0 0.0
    %1831 = vmatpush1.msra.mxu0 0.0
    %1832 = vmatprep.subr.mxu0 0.0
    %1833 = vmatpush1.msra.mxu0 0.0
    %1834 = vmatprep.subr.mxu0 0.0
    %1835 = vmatpush1.msra.mxu0 0.0
    %1836 = vmatprep.mubr.f32.mxu0 0.0
    %1837 = vmatmul.mubr.f32.gmra.mrb[0].mxu0 %v1699
    %v1838 = vpop.f32.mrb[0].mxu0
    %v1839 = vadd.f32 %v1696, %v1838
    %v1840 = vpop.f32.mrb[0].mxu0
    %v1841 = vadd.f32 %v1696, %v1840
    %1842 = vdwg.mxu0
    %1843 = vmatprep.subr.mxu0 0.0
    %1844 = vmatpush1.msra.mxu0 %v1685
    %1845 = vmatprep.subr.mxu0 0.0
    %1846 = vmatpush1.msra.mxu0 %v1690
    %1847 = vmatprep.subr.mxu0 0.0
    %1848 = vmatpush1.msra.mxu0 0.0
    %1849 = vmatprep.subr.mxu0 0.0
    %1850 = vmatpush1.msra.mxu0 0.0
    %1851 = vmatprep.subr.mxu0 0.0
    %1852 = vmatpush1.msra.mxu0 0.0
    %1853 = vmatprep.subr.mxu0 0.0
    %1854 = vmatpush1.msra.mxu0 0.0
    %1855 = vmatprep.subr.mxu0 0.0
    %1856 = vmatpush1.msra.mxu0 0.0
    %1857 = vmatprep.subr.mxu0 0.0
    %1858 = vmatpush1.msra.mxu0 0.0
    %1859 = vmatprep.subr.mxu0 0.0
    %1860 = vmatpush1.msra.mxu0 0.0
    %1861 = vmatprep.subr.mxu0 0.0
    %1862 = vmatpush1.msra.mxu0 0.0
    %1863 = vmatprep.subr.mxu0 0.0
    %1864 = vmatpush1.msra.mxu0 0.0
    %1865 = vmatprep.subr.mxu0 0.0
    %1866 = vmatpush1.msra.mxu0 0.0
    %1867 = vmatprep.subr.mxu0 0.0
    %1868 = vmatpush1.msra.mxu0 0.0
    %1869 = vmatprep.subr.mxu0 0.0
    %1870 = vmatpush1.msra.mxu0 0.0
    %1871 = vmatprep.subr.mxu0 0.0
    %1872 = vmatpush1.msra.mxu0 0.0
    %1873 = vmatprep.subr.mxu0 0.0
    %1874 = vmatpush1.msra.mxu0 0.0
    %1875 = vmatprep.subr.mxu0 0.0
    %1876 = vmatpush1.msra.mxu0 0.0
    %1877 = vmatprep.subr.mxu0 0.0
    %1878 = vmatpush1.msra.mxu0 0.0
    %1879 = vmatprep.subr.mxu0 0.0
    %1880 = vmatpush1.msra.mxu0 0.0
    %1881 = vmatprep.subr.mxu0 0.0
    %1882 = vmatpush1.msra.mxu0 0.0
    %1883 = vmatprep.subr.mxu0 0.0
    %1884 = vmatpush1.msra.mxu0 0.0
    %1885 = vmatprep.subr.mxu0 0.0
    %1886 = vmatpush1.msra.mxu0 0.0
    %1887 = vmatprep.subr.mxu0 0.0
    %1888 = vmatpush1.msra.mxu0 0.0
    %1889 = vmatprep.subr.mxu0 0.0
    %1890 = vmatpush1.msra.mxu0 0.0
    %1891 = vmatprep.subr.mxu0 0.0
    %1892 = vmatpush1.msra.mxu0 0.0
    %1893 = vmatprep.subr.mxu0 0.0
    %1894 = vmatpush1.msra.mxu0 0.0
    %1895 = vmatprep.subr.mxu0 0.0
    %1896 = vmatpush1.msra.mxu0 0.0
    %1897 = vmatprep.subr.mxu0 0.0
    %1898 = vmatpush1.msra.mxu0 0.0
    %1899 = vmatprep.subr.mxu0 0.0
    %1900 = vmatpush1.msra.mxu0 0.0
    %1901 = vmatprep.subr.mxu0 0.0
    %1902 = vmatpush1.msra.mxu0 0.0
    %1903 = vmatprep.subr.mxu0 0.0
    %1904 = vmatpush1.msra.mxu0 0.0
    %1905 = vmatprep.subr.mxu0 0.0
    %1906 = vmatpush1.msra.mxu0 0.0
    %1907 = vmatprep.mubr.f32.mxu0 0.0
    %1908 = vmatmul.mubr.f32.gmra.mrb[0].mxu0 %v1699
    %v1909 = vpop.f32.mrb[0].mxu0
    %v1910 = vadd.f32 %v1696, %v1909
    %v1911 = vpop.f32.mrb[0].mxu0
    %1912 = vdwg.mxu0
    %v1913 = vtanh.pop %v1768
    %v1914 = vtanh.pop %v1770
    %v1915 = vtanh.pop %v1839
    %v1916 = vtanh.pop %v1841
    %v1917 = vtanh.pop %v1910
    %v1918 = vld [vmem:[%s13] sm:$0x3]
    %v1919 = vld [vmem:[%s14] sm:$0x3]
    %1921 = vset.pattern.permute.xlu0 0
    %1922 = vperm.xlu0 %1921, %v1919
    %v1923 = vpop.permute.xlu0 %1922
    %vm1925 = vcmask 64512
    %v1927 = vsel %vm1925, %v1918, 0
    %1929 = vmatprep.subr.mxu0 %v1914
    %1930 = vmatpush1.msra.mxu0 %v1913
    %1931 = vmatprep.subr.mxu0 0.0
    %1932 = vmatpush1.msra.mxu0 0.0
    %1933 = vmatprep.subr.mxu0 0.0
    %1934 = vmatpush1.msra.mxu0 0.0
    %1935 = vmatprep.subr.mxu0 0.0
    %1936 = vmatpush1.msra.mxu0 0.0
    %1937 = vmatprep.subr.mxu0 0.0
    %1938 = vmatpush1.msra.mxu0 0.0
    %1939 = vmatprep.subr.mxu0 0.0
    %1940 = vmatpush1.msra.mxu0 0.0
    %1941 = vmatprep.subr.mxu0 0.0
    %1942 = vmatpush1.msra.mxu0 0.0
    %1943 = vmatprep.subr.mxu0 0.0
    %1944 = vmatpush1.msra.mxu0 0.0
    %1945 = vmatprep.subr.mxu0 0.0
    %1946 = vmatpush1.msra.mxu0 0.0
    %1947 = vmatprep.subr.mxu0 0.0
    %1948 = vmatpush1.msra.mxu0 0.0
    %1949 = vmatprep.subr.mxu0 0.0
    %1950 = vmatpush1.msra.mxu0 0.0
    %1951 = vmatprep.subr.mxu0 0.0
    %1952 = vmatpush1.msra.mxu0 0.0
    %1953 = vmatprep.subr.mxu0 0.0
    %1954 = vmatpush1.msra.mxu0 0.0
    %1955 = vmatprep.subr.mxu0 0.0
    %1956 = vmatpush1.msra.mxu0 0.0
    %1957 = vmatprep.subr.mxu0 0.0
    %1958 = vmatpush1.msra.mxu0 0.0
    %1959 = vmatprep.subr.mxu0 0.0
    %1960 = vmatpush1.msra.mxu0 0.0
    %1961 = vmatprep.subr.mxu0 0.0
    %1962 = vmatpush1.msra.mxu0 0.0
    %1963 = vmatprep.subr.mxu0 0.0
    %1964 = vmatpush1.msra.mxu0 0.0
    %1965 = vmatprep.subr.mxu0 0.0
    %1966 = vmatpush1.msra.mxu0 0.0
    %1967 = vmatprep.subr.mxu0 0.0
    %1968 = vmatpush1.msra.mxu0 0.0
    %1969 = vmatprep.subr.mxu0 0.0
    %1970 = vmatpush1.msra.mxu0 0.0
    %1971 = vmatprep.subr.mxu0 0.0
    %1972 = vmatpush1.msra.mxu0 0.0
    %1973 = vmatprep.subr.mxu0 0.0
    %1974 = vmatpush1.msra.mxu0 0.0
    %1975 = vmatprep.subr.mxu0 0.0
    %1976 = vmatpush1.msra.mxu0 0.0
    %1977 = vmatprep.subr.mxu0 0.0
    %1978 = vmatpush1.msra.mxu0 0.0
    %1979 = vmatprep.subr.mxu0 0.0
    %1980 = vmatpush1.msra.mxu0 0.0
    %1981 = vmatprep.subr.mxu0 0.0
    %1982 = vmatpush1.msra.mxu0 0.0
    %1983 = vmatprep.subr.mxu0 0.0
    %1984 = vmatpush1.msra.mxu0 0.0
    %1985 = vmatprep.subr.mxu0 0.0
    %1986 = vmatpush1.msra.mxu0 0.0
    %1987 = vmatprep.subr.mxu0 0.0
    %1988 = vmatpush1.msra.mxu0 0.0
    %1989 = vmatprep.subr.mxu0 0.0
    %1990 = vmatpush1.msra.mxu0 0.0
    %1991 = vmatprep.subr.mxu0 0.0
    %1992 = vmatpush1.msra.mxu0 0.0
    %1993 = vmatprep.mubr.f32.mxu0 0.0
    %1994 = vmatmul.mubr.f32.gmra.mrb[0].mxu0 %v1927
    %v1995 = vpop.f32.mrb[0].mxu0
    %v1996 = vadd.f32 %v1923, %v1995
    %v1997 = vpop.f32.mrb[0].mxu0
    %v1998 = vadd.f32 %v1923, %v1997
    %1999 = vdwg.mxu0
    %2000 = vmatprep.subr.mxu0 %v1916
    %2001 = vmatpush1.msra.mxu0 %v1915
    %2002 = vmatprep.subr.mxu0 0.0
    %2003 = vmatpush1.msra.mxu0 0.0
    %2004 = vmatprep.subr.mxu0 0.0
    %2005 = vmatpush1.msra.mxu0 0.0
    %2006 = vmatprep.subr.mxu0 0.0
    %2007 = vmatpush1.msra.mxu0 0.0
    %2008 = vmatprep.subr.mxu0 0.0
    %2009 = vmatpush1.msra.mxu0 0.0
    %2010 = vmatprep.subr.mxu0 0.0
    %2011 = vmatpush1.msra.mxu0 0.0
    %2012 = vmatprep.subr.mxu0 0.0
    %2013 = vmatpush1.msra.mxu0 0.0
    %2014 = vmatprep.subr.mxu0 0.0
    %2015 = vmatpush1.msra.mxu0 0.0
    %2016 = vmatprep.subr.mxu0 0.0
    %2017 = vmatpush1.msra.mxu0 0.0
    %2018 = vmatprep.subr.mxu0 0.0
    %2019 = vmatpush1.msra.mxu0 0.0
    %2020 = vmatprep.subr.mxu0 0.0
    %2021 = vmatpush1.msra.mxu0 0.0
    %2022 = vmatprep.subr.mxu0 0.0
    %2023 = vmatpush1.msra.mxu0 0.0
    %2024 = vmatprep.subr.mxu0 0.0
    %2025 = vmatpush1.msra.mxu0 0.0
    %2026 = vmatprep.subr.mxu0 0.0
    %2027 = vmatpush1.msra.mxu0 0.0
    %2028 = vmatprep.subr.mxu0 0.0
    %2029 = vmatpush1.msra.mxu0 0.0
    %2030 = vmatprep.subr.mxu0 0.0
    %2031 = vmatpush1.msra.mxu0 0.0
    %2032 = vmatprep.subr.mxu0 0.0
    %2033 = vmatpush1.msra.mxu0 0.0
    %2034 = vmatprep.subr.mxu0 0.0
    %2035 = vmatpush1.msra.mxu0 0.0
    %2036 = vmatprep.subr.mxu0 0.0
    %2037 = vmatpush1.msra.mxu0 0.0
    %2038 = vmatprep.subr.mxu0 0.0
    %2039 = vmatpush1.msra.mxu0 0.0
    %2040 = vmatprep.subr.mxu0 0.0
    %2041 = vmatpush1.msra.mxu0 0.0
    %2042 = vmatprep.subr.mxu0 0.0
    %2043 = vmatpush1.msra.mxu0 0.0
    %2044 = vmatprep.subr.mxu0 0.0
    %2045 = vmatpush1.msra.mxu0 0.0
    %2046 = vmatprep.subr.mxu0 0.0
    %2047 = vmatpush1.msra.mxu0 0.0
    %2048 = vmatprep.subr.mxu0 0.0
    %2049 = vmatpush1.msra.mxu0 0.0
    %2050 = vmatprep.subr.mxu0 0.0
    %2051 = vmatpush1.msra.mxu0 0.0
    %2052 = vmatprep.subr.mxu0 0.0
    %2053 = vmatpush1.msra.mxu0 0.0
    %2054 = vmatprep.subr.mxu0 0.0
    %2055 = vmatpush1.msra.mxu0 0.0
    %2056 = vmatprep.subr.mxu0 0.0
    %2057 = vmatpush1.msra.mxu0 0.0
    %2058 = vmatprep.subr.mxu0 0.0
    %2059 = vmatpush1.msra.mxu0 0.0
    %2060 = vmatprep.subr.mxu0 0.0
    %2061 = vmatpush1.msra.mxu0 0.0
    %2062 = vmatprep.subr.mxu0 0.0
    %2063 = vmatpush1.msra.mxu0 0.0
    %2064 = vmatprep.mubr.f32.mxu0 0.0
    %2065 = vmatmul.mubr.f32.gmra.mrb[0].mxu0 %v1927
    %v2066 = vpop.f32.mrb[0].mxu0
    %v2067 = vadd.f32 %v1923, %v2066
    %v2068 = vpop.f32.mrb[0].mxu0
    %v2069 = vadd.f32 %v1923, %v2068
    %2070 = vdwg.mxu0
    %2071 = vmatprep.subr.mxu0 0.0
    %2072 = vmatpush1.msra.mxu0 %v1917
    %2073 = vmatprep.subr.mxu0 0.0
    %2074 = vmatpush1.msra.mxu0 0.0
    %2075 = vmatprep.subr.mxu0 0.0
    %2076 = vmatpush1.msra.mxu0 0.0
    %2077 = vmatprep.subr.mxu0 0.0
    %2078 = vmatpush1.msra.mxu0 0.0
    %2079 = vmatprep.subr.mxu0 0.0
    %2080 = vmatpush1.msra.mxu0 0.0
    %2081 = vmatprep.subr.mxu0 0.0
    %2082 = vmatpush1.msra.mxu0 0.0
    %2083 = vmatprep.subr.mxu0 0.0
    %2084 = vmatpush1.msra.mxu0 0.0
    %2085 = vmatprep.subr.mxu0 0.0
    %2086 = vmatpush1.msra.mxu0 0.0
    %2087 = vmatprep.subr.mxu0 0.0
    %2088 = vmatpush1.msra.mxu0 0.0
    %2089 = vmatprep.subr.mxu0 0.0
    %2090 = vmatpush1.msra.mxu0 0.0
    %2091 = vmatprep.subr.mxu0 0.0
    %2092 = vmatpush1.msra.mxu0 0.0
    %2093 = vmatprep.subr.mxu0 0.0
    %2094 = vmatpush1.msra.mxu0 0.0
    %2095 = vmatprep.subr.mxu0 0.0
    %2096 = vmatpush1.msra.mxu0 0.0
    %2097 = vmatprep.subr.mxu0 0.0
    %2098 = vmatpush1.msra.mxu0 0.0
    %2099 = vmatprep.subr.mxu0 0.0
    %2100 = vmatpush1.msra.mxu0 0.0
    %2101 = vmatprep.subr.mxu0 0.0
    %2102 = vmatpush1.msra.mxu0 0.0
    %2103 = vmatprep.subr.mxu0 0.0
    %2104 = vmatpush1.msra.mxu0 0.0
    %2105 = vmatprep.subr.mxu0 0.0
    %2106 = vmatpush1.msra.mxu0 0.0
    %2107 = vmatprep.subr.mxu0 0.0
    %2108 = vmatpush1.msra.mxu0 0.0
    %2109 = vmatprep.subr.mxu0 0.0
    %2110 = vmatpush1.msra.mxu0 0.0
    %2111 = vmatprep.subr.mxu0 0.0
    %2112 = vmatpush1.msra.mxu0 0.0
    %2113 = vmatprep.subr.mxu0 0.0
    %2114 = vmatpush1.msra.mxu0 0.0
    %2115 = vmatprep.subr.mxu0 0.0
    %2116 = vmatpush1.msra.mxu0 0.0
    %2117 = vmatprep.subr.mxu0 0.0
    %2118 = vmatpush1.msra.mxu0 0.0
    %2119 = vmatprep.subr.mxu0 0.0
    %2120 = vmatpush1.msra.mxu0 0.0
    %2121 = vmatprep.subr.mxu0 0.0
    %2122 = vmatpush1.msra.mxu0 0.0
    %2123 = vmatprep.subr.mxu0 0.0
    %2124 = vmatpush1.msra.mxu0 0.0
    %2125 = vmatprep.subr.mxu0 0.0
    %2126 = vmatpush1.msra.mxu0 0.0
    %2127 = vmatprep.subr.mxu0 0.0
    %2128 = vmatpush1.msra.mxu0 0.0
    %2129 = vmatprep.subr.mxu0 0.0
    %2130 = vmatpush1.msra.mxu0 0.0
    %2131 = vmatprep.subr.mxu0 0.0
    %2132 = vmatpush1.msra.mxu0 0.0
    %2133 = vmatprep.subr.mxu0 0.0
    %2134 = vmatpush1.msra.mxu0 0.0
    %2135 = vmatprep.mubr.f32.mxu0 0.0
    %2136 = vmatmul.mubr.f32.gmra.mrb[0].mxu0 %v1927
    %v2137 = vpop.f32.mrb[0].mxu0
    %v2138 = vadd.f32 %v1923, %v2137
    %v2139 = vpop.f32.mrb[0].mxu0
    %2140 = vdwg.mxu0
    %v2146 = vcombine.low %v1996, %v1998
    %v2147 = vcombine.low %v2067, %v2069
    %v2149 = vunpack.c.l.s4 1983009808
    %v2150 = vunpack.c.0.s8 %v2149
    %v2151 = vlaneseq
    %v2152 = vshrl.u32 %v2151, 7
    %v2153 = vsub.s32 %v2150, %v2152
    %v2154 = vrot.slane %v2146, %v2153
    %v2156 = vunpack.c.l.s4 1983009808
    %v2157 = vunpack.c.0.s8 %v2156
    %v2158 = vlaneseq
    %v2159 = vshrl.u32 %v2158, 7
    %v2160 = vsub.s32 %v2157, %v2159
    %v2161 = vrot.slane %v2147, %v2160
    %v2162 = vcombine.low %v2154, %v2161
    %v2164 = vunpack.c.l.s4 1983009808
    %v2165 = vunpack.c.0.s8 %v2164
    %v2166 = vlaneseq
    %v2167 = vshrl.u32 %v2166, 7
    %v2168 = vsub.s32 %v2165, %v2167
    %v2169 = vrot.slane %v2138, %v2168
    %2172 = vst [vmem:[#allocation2] sm:$0xff] %v2162
    %2173 = vst [vmem:[#allocation2 + $0x8] sm:$0x3] %v2169
    // Predicated region
    $region62: #{tpu_custom_call.1} parent=1 // pred_check
      _
    $region63: #{tpu_custom_call.1} parent=1 // pred_check_branch
      %2175 = sbr.rel (0) target = $region65
    $region64: #{tpu_custom_call.1} parent=1 // pred_region
      %s2177 = ssub.s32 160, 160
      %2178 = vsyncadd [#allocation3], %s2177
      %s2180 = sshll.u32 [#allocation2], 4
      %s2181 = int_to_ptr.vmem [resolvable:$true] %s2180
      %2183 = dma.vmem_to_hbm [thread:$0]  %s2181, 160, %s15, [#allocation3]
    $region65: #{tpu_custom_call.1} parent=1 // pred_fallthru
      _
    // Predicated region
    $region66: #{tpu_custom_call.1} parent=1 // pred_check
      _
    $region67: #{tpu_custom_call.1} parent=1 // pred_check_branch
      %2185 = sbr.rel (0) target = $region69
    $region68: #{tpu_custom_call.1} parent=1 // pred_region
      %2186 = dma.done [#allocation3], 160
    $region69: #{tpu_custom_call.1} parent=1 // pred_fallthru
      _
    %2187 = vsyncpa [#allocation3], 1

</llo_original>
